<compile_context>
chip_gen: v7x
topology: tpu7x:2x2x1
jax: 0.10.0
libtpu: 0.0.40
codegen_flags: <defaults>
</compile_context>

<pallas_src>
import functools

import jax
import jax.numpy as jnp
from jax.experimental import pallas as pl
from jax.experimental.pallas import tpu as pltpu


# ----------------------------------------------------------------------------
# Kernel
# ----------------------------------------------------------------------------
def mha_kernel(x_ref, wqkv_ref, wo_ref, o_ref, kv_ref, *, head_num, q_tile):
    """Multi-head self attention for one (batch row, query tile).

    x_ref   : (T, E)     bf16  full token block of one batch row
    wqkv_ref: (E, 3E)    bf16  fused QKV weight, columns [q|k|v], (head, d); scale folded into q
    wo_ref  : (E, E)     bf16  output projection, pre-transposed for x @ Wo^T
    o_ref   : (tq, E)    f32   output tile
    kv_ref  : (T, 2E)    bf16  VMEM scratch holding [K | V] for the current batch row
    """
    T, E = x_ref.shape
    d = E // head_num
    hd = head_num * d                       # == E

    # --- K/V projection: once per batch row (query axis is "arbitrary"). ---------
    @pl.when(pl.program_id(1) == 0)
    def _():
        kv = jnp.dot(x_ref[...], wqkv_ref[:, hd:],
                     preferred_element_type=jnp.float32)       # (T, 2*hd) f32 acc
        kv_ref[...] = kv.astype(jnp.bfloat16)                  # keep only bf16 copy live

    # --- Q projection for this query tile (scale pre-folded into the weight). ----
    q_start = pl.multiple_of(pl.program_id(1) * q_tile, q_tile)
    x_q = x_ref[pl.ds(q_start, q_tile), :]                     # (tq, E) bf16, no extra DMA
    q = jnp.dot(x_q, wqkv_ref[:, :hd],
                preferred_element_type=jnp.float32)            # (tq, hd) f32

    # Split heads: (t, h*d) -> (h, t, d); cast to bf16 BEFORE the relayout.
    qh = jnp.swapaxes(q.astype(jnp.bfloat16).reshape(q_tile, head_num, d), 0, 1)
    k = kv_ref[:, :hd]                                         # (T, hd) bf16
    v = kv_ref[:, hd:]
    kh = jnp.swapaxes(k.reshape(T, head_num, d), 0, 1)         # (h, T, d)
    vh = jnp.swapaxes(v.reshape(T, head_num, d), 0, 1)         # (h, T, d)

    # --- Attention scores (batched over heads on the MXU). -----------------------
    s = jax.lax.dot_general(qh, kh, (((2,), (2,)), ((0,), (0,))),
                            preferred_element_type=jnp.float32)      # (h, tq, T)

    # Softmax over keys: stats in f32, exp on bf16 operand (bf16 EUP path).
    m = jnp.max(s, axis=-1, keepdims=True)                            # f32
    p = jnp.exp((s - m).astype(jnp.bfloat16))                         # bf16 probs
    l = jnp.sum(p.astype(jnp.float32), axis=-1, keepdims=True)        # f32 denom

    ctx = jax.lax.dot_general(p, vh, (((2,), (1,)), ((0,), (0,))),
                              preferred_element_type=jnp.float32)     # (h, tq, d)
    # Normalize the small (h,tq,d) context rather than the (h,tq,T) probabilities.
    ctx = ctx * pl.reciprocal(l, approx=True)

    # 'b h t d -> b t (h d)', then lane-dense output projection.
    ctx2d = jnp.swapaxes(ctx.astype(jnp.bfloat16), 0, 1).reshape(q_tile, hd)
    out = jnp.dot(ctx2d, wo_ref[...], preferred_element_type=jnp.float32)  # (tq, E)
    o_ref[...] = out.astype(o_ref.dtype)


# ----------------------------------------------------------------------------
# Host-side weight packing (matches rearrange 'b t (d k h) -> k b h t d')
# ----------------------------------------------------------------------------
def pack_qkv_weight(w_qkv, head_num, q_scale=1.0):
    """nn.Linear(E, 3E, bias=False).weight (3E, E) -> (E, 3E) matrix W such that
    (x @ W) columns are [q | k | v], each ordered (head, d): the module's
    '(d k h)' interleaving is pre-permuted so the kernel uses static lane slices.
    The attention scale is folded into the q columns (module MULTIPLIES by dk)."""
    out_dim, E = w_qkv.shape
    h = head_num
    d = E // h
    assert out_dim == 3 * E and E % h == 0
    wt = w_qkv.T.reshape(E, d, 3, h)                 # original col j = d*(3h)+k*h+h
    packed = jnp.transpose(wt, (0, 2, 3, 1)).reshape(E, 3 * h * d)
    return packed.at[:, : h * d].multiply(q_scale)


def _pick_q_tile(T, cap=256):
    """Largest query tile <= cap that divides T and is a multiple of 8."""
    if T <= cap:
        return T
    for cand in range(cap, 0, -8):
        if T % cand == 0:
            return cand
    return T


# ----------------------------------------------------------------------------
# Wrapper
# ----------------------------------------------------------------------------
def multi_head_attention(x, w_qkv, w_o, *, head_num, q_tile=None):
    """x: (B, T, E); w_qkv: (3E, E), w_o: (E, E) — raw PyTorch Linear weights."""
    B, T, E = x.shape
    assert E % head_num == 0, "embedding_dim must be divisible by head_num"
    assert E % 128 == 0, "embedding_dim must be a multiple of 128 (lane width)"
    if q_tile is None:
        q_tile = _pick_q_tile(T)
    assert T % q_tile == 0
    assert q_tile == T or q_tile % 8 == 0

    d = E // head_num
    scale = float(d ** 0.5)                           # self.dk — MULTIPLIED, per module
    w_qkv_packed = pack_qkv_weight(w_qkv, head_num, q_scale=scale).astype(jnp.bfloat16)
    w_o_t = w_o.T.astype(jnp.bfloat16)                # pre-transposed for x @ Wo^T
    x_bf16 = x.astype(jnp.bfloat16)                   # halve HBM read traffic

    # Advisory cost estimate (QKV projection + attention + output projection).
    flops = (2 * B * T * E * 3 * E
             + 2 * B * head_num * T * T * d * 2
             + 2 * B * T * E * E)
    cost = pl.CostEstimate(
        flops=flops,
        transcendentals=B * head_num * T * T,
        bytes_accessed=(x_bf16.size * 2 + w_qkv_packed.size * 2
                        + w_o_t.size * 2 + B * T * E * 4))

    # Rough per-core VMEM footprint; only raise the scoped limit when needed.
    vmem_bytes = (
        2 * T * E * 2                 # x block (bf16), double-buffered
        + E * 3 * E * 2               # fused QKV weight (bf16), single-buffered
        + E * E * 2                   # out-proj weight (bf16), single-buffered
        + 2 * q_tile * E * 4          # output block (f32), double-buffered
        + T * 2 * E * 2               # K/V VMEM scratch (bf16)
        + head_num * q_tile * T * 6   # score logits (f32) + probs (bf16)
        + 6 * q_tile * E * 4          # q / ctx / out f32 intermediates
    )
    vmem_limit = None
    if vmem_bytes * 3 // 2 > 32 * 1024 * 1024:
        vmem_limit = min(64 * 1024 * 1024, vmem_bytes * 3 // 2)   # 64 MiB cap for v7x

    kernel = functools.partial(mha_kernel, head_num=head_num, q_tile=q_tile)
    grid = (B, T // q_tile)
    return pl.pallas_call(
        kernel,
        out_shape=jax.ShapeDtypeStruct((B, T, E), jnp.float32),
        grid=grid,
        in_specs=[
            # Full tokens of one batch row (source of Q, K and V).
            pl.BlockSpec((None, T, E), lambda b, qi: (b, 0, 0)),
            # Fused QKV weight and output projection: constant block index ->
            # single-buffered to avoid wasting VMEM.
            pl.BlockSpec((E, 3 * E), lambda b, qi: (0, 0),
                         pipeline_mode=pl.Buffered(1)),
            pl.BlockSpec((E, E), lambda b, qi: (0, 0),
                         pipeline_mode=pl.Buffered(1)),
        ],
        out_specs=pl.BlockSpec((None, q_tile, E), lambda b, qi: (b, qi, 0)),
        scratch_shapes=[pltpu.VMEM((T, 2 * E), jnp.bfloat16)],   # cached [K|V] per batch row
        compiler_params=pltpu.CompilerParams(
            dimension_semantics=("parallel", "arbitrary"),
            vmem_limit_bytes=vmem_limit),
        cost_estimate=cost,
    )(x_bf16, w_qkv_packed, w_o_t)


# ----------------------------------------------------------------------------
# Pure-JAX reference (exact module semantics, f32)
# ----------------------------------------------------------------------------
def mha_reference(x, w_qkv, w_o, head_num):
    B, T, E = x.shape
    h = head_num
    d = E // h
    dk = (E // h) ** 0.5
    hp = jax.lax.Precision.HIGHEST
    qkv = jnp.einsum('bte,oe->bto', x, w_qkv, precision=hp)
    q, k, v = jnp.transpose(qkv.reshape(B, T, d, 3, h), (3, 0, 4, 1, 2))  # k b h t d
    energy = jnp.einsum('bhid,bhjd->bhij', q, k, precision=hp) * dk
    attn = jax.nn.softmax(energy, axis=-1)
    ctx = jnp.einsum('bhij,bhjd->bhid', attn, v, precision=hp)
    ctx = jnp.transpose(ctx, (0, 2, 1, 3)).reshape(B, T, h * d)           # b t (h d)
    return jnp.einsum('bte,oe->bto', ctx, w_o, precision=hp)


# ----------------------------------------------------------------------------
if __name__ == "__main__":
    B, T, E, head_num = 2, 16, 128, 8     # small, lane-dense (E multiple of 128)

    key = jax.random.PRNGKey(0)
    kx, kqkv, ko = jax.random.split(key, 3)
    x = jax.random.normal(kx, (B, T, E), jnp.float32)
    w_qkv = jax.random.normal(kqkv, (3 * E, E), jnp.float32) * 0.02   # (out=3E, in=E)
    w_o = jax.random.normal(ko, (E, E), jnp.float32) * 0.02           # (out=E, in=E)

    out = jax.block_until_ready(multi_head_attention(x, w_qkv, w_o, head_num=head_num))

    ref = mha_reference(x, w_qkv, w_o, head_num)
    assert out.shape == (B, T, E)
    assert bool(jnp.all(jnp.isfinite(out)))
    max_err = float(jnp.max(jnp.abs(out - ref)))
    assert max_err < 2e-2, f"max_abs_err={max_err}"   # bf16-matmul / bf16-exp tolerance
    print("KERNEL_OK")
</pallas_src>

<mosaic_0001>
module attributes {stable_mosaic.version = 11 : i64} {
  func.func @mha_kernel(%arg0: i32, %arg1: i32, %arg2: memref<1x16x128xbf16, #tpu.memory_space<vmem>>, %arg3: memref<128x384xbf16, #tpu.memory_space<vmem>>, %arg4: memref<128x128xbf16, #tpu.memory_space<vmem>>, %arg5: memref<1x16x128xf32, #tpu.memory_space<vmem>>, %arg6: memref<16x256xbf16, #tpu.memory_space<vmem>>) attributes {dimension_semantics = [#tpu.dimension_semantics<parallel>, #tpu.dimension_semantics<arbitrary>], iteration_bounds = array<i64: 2, 1>, scalar_prefetch = 0 : i64, scratch_operands = 1 : i64, tpu.core_type = #tpu.core_type<tc>, window_params = [{transform_indices = @transform_0, window_bounds = array<i64: 1, 16, 128>}, {pipeline_mode = #tpu.pipeline_mode<synchronous>, transform_indices = @transform_1, window_bounds = array<i64: 128, 384>}, {pipeline_mode = #tpu.pipeline_mode<synchronous>, transform_indices = @transform_2, window_bounds = array<i64: 128, 128>}, {transform_indices = @transform_3, window_bounds = array<i64: 1, 16, 128>}]} {
    %c0_i32 = arith.constant 0 : i32
    %0 = arith.cmpi eq, %arg1, %c0_i32 : i32
    %1 = arith.extui %0 : i1 to i32
    %c0_i32_0 = arith.constant 0 : i32
    %2 = arith.cmpi ne, %1, %c0_i32_0 : i32
    scf.if %2 {
      %c0_17 = arith.constant 0 : index
      %c0_18 = arith.constant 0 : index
      %c0_19 = arith.constant 0 : index
      %41 = vector.load %arg2[%c0_17, %c0_18, %c0_19] : memref<1x16x128xbf16, #tpu.memory_space<vmem>>, vector<1x16x128xbf16>
      %42 = vector.shape_cast %41 : vector<1x16x128xbf16> to vector<16x128xbf16>
      %c0_20 = arith.constant 0 : index
      %c128_21 = arith.constant 128 : index
      %43 = vector.load %arg3[%c0_20, %c128_21] : memref<128x384xbf16, #tpu.memory_space<vmem>>, vector<128x256xbf16>
      %cst_22 = arith.constant dense<0.000000e+00> : vector<16x256xf32>
      %44 = tpu.matmul %42, %43, %cst_22 {dimension_numbers = #tpu.dot_dimension_numbers<[1], [0], [0], [1], [0, 0, 1, 1], [], []>} : vector<16x128xbf16>, vector<128x256xbf16>, vector<16x256xf32> -> vector<16x256xf32>
      %45 = arith.truncf %44 : vector<16x256xf32> to vector<16x256xbf16>
      %c0_23 = arith.constant 0 : index
      %c0_24 = arith.constant 0 : index
      %46 = vector.load %arg6[%c0_23, %c0_24] : memref<16x256xbf16, #tpu.memory_space<vmem>>, vector<16x256xbf16>
      tpu.vector_store %arg6[%c0_23, %c0_24], %45 {strides = array<i32>} : memref<16x256xbf16, #tpu.memory_space<vmem>>, vector<16x256xbf16>,
    } else {
    }
    %c16_i32 = arith.constant 16 : i32
    %3 = arith.muli %arg1, %c16_i32 : i32
    %4 = tpu.assume_multiple %3, 16 : i32
    %c0 = arith.constant 0 : index
    %5 = arith.index_cast %4 : i32 to index
    %c0_1 = arith.constant 0 : index
    %6 = vector.load %arg2[%c0, %5, %c0_1] : memref<1x16x128xbf16, #tpu.memory_space<vmem>>, vector<1x16x128xbf16>
    %7 = vector.shape_cast %6 : vector<1x16x128xbf16> to vector<16x128xbf16>
    %c0_2 = arith.constant 0 : index
    %c0_3 = arith.constant 0 : index
    %8 = vector.load %arg3[%c0_2, %c0_3] : memref<128x384xbf16, #tpu.memory_space<vmem>>, vector<128x128xbf16>
    %cst = arith.constant dense<0.000000e+00> : vector<16x128xf32>
    %9 = tpu.matmul %7, %8, %cst {dimension_numbers = #tpu.dot_dimension_numbers<[1], [0], [0], [1], [0, 0, 1, 1], [], []>} : vector<16x128xbf16>, vector<128x128xbf16>, vector<16x128xf32> -> vector<16x128xf32>
    %10 = arith.truncf %9 : vector<16x128xf32> to vector<16x128xbf16>
    %11 = vector.shape_cast %10 : vector<16x128xbf16> to vector<16x8x16xbf16>
    %12 = tpu.transpose %11, [1, 0, 2] : vector<16x8x16xbf16> -> vector<8x16x16xbf16>
    %c0_4 = arith.constant 0 : index
    %c0_5 = arith.constant 0 : index
    %13 = vector.load %arg6[%c0_4, %c0_5] : memref<16x256xbf16, #tpu.memory_space<vmem>>, vector<16x128xbf16>
    %c0_6 = arith.constant 0 : index
    %c128 = arith.constant 128 : index
    %14 = vector.load %arg6[%c0_6, %c128] : memref<16x256xbf16, #tpu.memory_space<vmem>>, vector<16x128xbf16>
    %15 = vector.shape_cast %13 : vector<16x128xbf16> to vector<16x8x16xbf16>
    %16 = tpu.transpose %15, [1, 0, 2] : vector<16x8x16xbf16> -> vector<8x16x16xbf16>
    %17 = vector.shape_cast %14 : vector<16x128xbf16> to vector<16x8x16xbf16>
    %18 = tpu.transpose %17, [1, 0, 2] : vector<16x8x16xbf16> -> vector<8x16x16xbf16>
    %cst_7 = arith.constant dense<0.000000e+00> : vector<8x16x16xf32>
    %19 = tpu.matmul %12, %16, %cst_7 {dimension_numbers = #tpu.dot_dimension_numbers<[2], [2], [1], [1], [0, 0, 0, 1, 1, 1], [0], [0]>} : vector<8x16x16xbf16>, vector<8x16x16xbf16>, vector<8x16x16xf32> -> vector<8x16x16xf32>
    %cst_8 = arith.constant dense<0xFF800000> : vector<8x16xf32>
    %20 = vector.multi_reduction <maximumf>, %19, %cst_8 [2] : vector<8x16x16xf32> to vector<8x16xf32>
    %21 = vector.shape_cast %20 : vector<8x16xf32> to vector<8x16x1xf32>
    %22 = vector.broadcast %21 : vector<8x16x1xf32> to vector<8x16x16xf32>
    %23 = arith.subf %19, %22 : vector<8x16x16xf32>
    %24 = arith.truncf %23 : vector<8x16x16xf32> to vector<8x16x16xbf16>
    %25 = math.exp %24 : vector<8x16x16xbf16>
    %26 = arith.extf %25 : vector<8x16x16xbf16> to vector<8x16x16xf32>
    %cst_9 = arith.constant dense<0.000000e+00> : vector<8x16xf32>
    %27 = vector.multi_reduction <add>, %26, %cst_9 [2] : vector<8x16x16xf32> to vector<8x16xf32>
    %28 = vector.shape_cast %27 : vector<8x16xf32> to vector<8x16x1xf32>
    %cst_10 = arith.constant dense<0.000000e+00> : vector<8x16x16xf32>
    %29 = tpu.matmul %25, %18, %cst_10 {dimension_numbers = #tpu.dot_dimension_numbers<[2], [1], [1], [2], [0, 0, 0, 1, 1, 2], [0], [0]>} : vector<8x16x16xbf16>, vector<8x16x16xbf16>, vector<8x16x16xf32> -> vector<8x16x16xf32>
    %30 = tpu.reciprocal %28 {approx = true} : vector<8x16x1xf32> -> vector<8x16x1xf32>
    %31 = vector.broadcast %30 : vector<8x16x1xf32> to vector<8x16x16xf32>
    %32 = arith.mulf %29, %31 : vector<8x16x16xf32>
    %33 = arith.truncf %32 : vector<8x16x16xf32> to vector<8x16x16xbf16>
    %34 = tpu.transpose %33, [1, 0, 2] : vector<8x16x16xbf16> -> vector<16x8x16xbf16>
    %35 = vector.shape_cast %34 : vector<16x8x16xbf16> to vector<16x128xbf16>
    %c0_11 = arith.constant 0 : index
    %c0_12 = arith.constant 0 : index
    %36 = vector.load %arg4[%c0_11, %c0_12] : memref<128x128xbf16, #tpu.memory_space<vmem>>, vector<128x128xbf16>
    %cst_13 = arith.constant dense<0.000000e+00> : vector<16x128xf32>
    %37 = tpu.matmul %35, %36, %cst_13 {dimension_numbers = #tpu.dot_dimension_numbers<[1], [0], [0], [1], [0, 0, 1, 1], [], []>} : vector<16x128xbf16>, vector<128x128xbf16>, vector<16x128xf32> -> vector<16x128xf32>
    %c0_14 = arith.constant 0 : index
    %c0_15 = arith.constant 0 : index
    %c0_16 = arith.constant 0 : index
    %38 = vector.load %arg5[%c0_14, %c0_15, %c0_16] : memref<1x16x128xf32, #tpu.memory_space<vmem>>, vector<1x16x128xf32>
    %39 = vector.shape_cast %38 : vector<1x16x128xf32> to vector<16x128xf32>
    %40 = vector.shape_cast %37 : vector<16x128xf32> to vector<1x16x128xf32>
    tpu.vector_store %arg5[%c0_14, %c0_15, %c0_16], %40 {strides = array<i32>} : memref<1x16x128xf32, #tpu.memory_space<vmem>>, vector<1x16x128xf32>,
    return
  }
  func.func @transform_0(%arg0: i32, %arg1: i32) -> (i32, i32, i32) {
    %c0_i32 = arith.constant 0 : i32
    %c0_i32_0 = arith.constant 0 : i32
    %c0_i32_1 = arith.constant 0 : i32
    return %arg0, %c0_i32, %c0_i32_0 : i32, i32, i32
  }
  func.func @transform_1(%arg0: i32, %arg1: i32) -> (i32, i32) {
    %c0_i32 = arith.constant 0 : i32
    %c0_i32_0 = arith.constant 0 : i32
    %c0_i32_1 = arith.constant 0 : i32
    return %c0_i32, %c0_i32_0 : i32, i32
  }
  func.func @transform_2(%arg0: i32, %arg1: i32) -> (i32, i32) {
    %c0_i32 = arith.constant 0 : i32
    %c0_i32_0 = arith.constant 0 : i32
    %c0_i32_1 = arith.constant 0 : i32
    return %c0_i32, %c0_i32_0 : i32, i32
  }
  func.func @transform_3(%arg0: i32, %arg1: i32) -> (i32, i32, i32) {
    %c0_i32 = arith.constant 0 : i32
    %c0_i32_0 = arith.constant 0 : i32
    return %arg0, %arg1, %c0_i32 : i32, i32, i32
  }
}

</mosaic_0001>

<llo_original>
// kernel: tpu_custom_call.1
$region0: #{tpu_custom_call.1}
  #allocation0 [shape = 'u32[]', space=smem, size = 0x4, offset = 0x4, fixed_abs, tag = 'smem constant byte address 0x4 - core index']
  #allocation1 [shape = 'u32[144,128]{1,0:T(1,128)}', space=vmem, size = 0x12000, scoped, tag = 'internal scratch']
  #allocation2 [shape = 'bf16[16,256]{1,0:T(16,128)(2,1)}', space=vmem, size = 0x2000, scoped, tag = 'scratch operand']
  %s0 = inlined_call_operand.hbm [shape: bf16[2,16,128], index: 0, kind: input, shape index: {}]
  %s1 = inlined_call_operand.hbm [shape: bf16[128,384], index: 1, kind: input, shape index: {}]
  %s2 = inlined_call_operand.hbm [shape: bf16[128,128], index: 2, kind: input, shape index: {}]
  %s3 = inlined_call_operand.hbm [shape: f32[2,16,128], index: 3, kind: output, shape index: {}]
  %s4 = sld [smem:[#allocation0]]
  $region61: #{tpu_custom_call.1} parent=0
    _
  %s6 = ssub.s32 1, %s4
  %s7 = scalar_select 0, %s6, %s4
  $region1: #{tpu_custom_call.1} parent=0
    #allocation3 [shape = 'u8[8192]{0}', space=vmem, size = 0x2000, scoped, tag = 'input window, operand 0']
    #allocation4 [shape = 's32[2]{0}', space=sflag, size = 0x8, scoped, tag = 'scoped memory for tpu_custom_call.1']
    #allocation5 [shape = 's32[2]{0}', space=sflag, size = 0x8, scoped, tag = 'scoped memory for tpu_custom_call.1']
    #allocation6 [shape = 'u8[98304]{0}', space=vmem, size = 0x18000, scoped, tag = 'input window, operand 1, single buffered']
    #allocation7 [shape = 's32[1]{0}', space=sflag, size = 0x4, scoped, tag = 'scoped memory for tpu_custom_call.1']
    #allocation8 [shape = 'u8[32768]{0}', space=vmem, size = 0x8000, scoped, tag = 'input window, operand 2, single buffered']
    #allocation9 [shape = 'u8[16384]{0}', space=vmem, size = 0x4000, scoped, tag = 'output window, operand 0']
    %8 = vsyncpa [#allocation4], 0
    %s9 = scalar_lea.sflag [#allocation4], 1
    %10 = vsyncpa %s9, 0
    %11 = vsyncpa [#allocation7], 0
    %12 = vsyncpa [#allocation5], 0
    %s13 = scalar_lea.sflag [#allocation5], 1
    %14 = vsyncpa %s13, 0
    loop: start=0, step=1, limit=4
    $region2: #{tpu_custom_call.1} parent=1 // loop_pre_header
      _
    $region3: #{tpu_custom_call.1} parent=1 // loop_header
      %s16 = sphi 0, %s20
      %p17 = scmp.ge.s32.totalorder %s16, 4
      %s23 = sphi 0, %s35
      %s24 = sphi 0, %s31
      %s25 = sphi 0, %s23
      %s26 = sphi 0, %s24
      %s27 = sphi 0, %s25
      %s28 = sphi 0, %s26
      %s38 = sphi 0, %s40
      %s41 = sphi 0, %s38
      %s42 = sphi 0, %s41
      %s58 = sphi 0, %s42
      %s62 = sphi 0, %s62
      %s64 = sphi 0, %s62
      %s65 = sphi 0, %s64
      %s79 = sphi 0, %s65
      %s83 = sphi 0, %s83
      %s85 = sphi 0, %s83
      %s86 = sphi 0, %s85
      %s100 = sphi 0, %s86
      %s108 = sphi 0, %s110
      %s111 = sphi 0, %s108
      %s112 = sphi 0, %s111
      %s128 = sphi 0, %s112
    $region4: #{tpu_custom_call.1} parent=1 // loop_header_branch
      %19 = sbr.rel (%p17) target = $region8
    $region5: #{tpu_custom_call.1} parent=1 // loop_body
      %s21 = ssub.s32 %s16, 1
      %s22 = ssub.s32 %s16, 2
      %s29 = sadd.s32 1, %s24
      %p30 = scmp.ge.s32.totalorder %s29, 1
      %s31 = scalar_select %p30, 0, %s29
      %s32 = sadd.s32 1, %s23
      %s33 = scalar_select %p30, %s32, %s23
      %p34 = scmp.ge.s32.totalorder %s33, 2
      %s35 = scalar_select %p34, 0, %s33
      %s36 = ssub.s32 %s23, %s35
      %p37 = scmp.eq.s32.totalorder %s36, 0
      %s39 = sadd.s32 %s38, 1
      %s40 = scalar_select %p37, %s38, %s39
      %p43 = pneg %p37
      %p44 = scmp.eq.s32.totalorder %s16, 1
      %p45 = por %p43, %p44
      %p46 = scmp.ne.s32.totalorder %s38, %s41
      %p47 = scmp.eq.s32.totalorder %s16, 0
      %p48 = por %p46, %p47
      %p49 = scmp.ne.s32.totalorder %s38, %s41
      %p50 = scmp.eq.s32.totalorder %s21, 1
      %p51 = por %p49, %p50
      %p52 = scmp.ne.s32.totalorder %s41, %s42
      %p53 = scmp.eq.s32.totalorder %s21, 0
      %p54 = por %p52, %p53
      %p55 = scmp.ne.s32.totalorder %s41, %s42
      %p56 = scmp.eq.s32.totalorder %s22, 1
      %p57 = por %p55, %p56
      %p59 = scmp.ne.s32.totalorder %s42, %s58
      %p60 = scmp.eq.s32.totalorder %s22, 0
      %p61 = por %p59, %p60
      %s63 = sadd.s32 %s62, 1
      %p66 = scmp.eq.s32.totalorder %s16, 1
      %p67 = scmp.ne.s32.totalorder %s62, %s64
      %p68 = scmp.eq.s32.totalorder %s16, 0
      %p69 = por %p67, %p68
      %p70 = scmp.ne.s32.totalorder %s62, %s64
      %p71 = scmp.eq.s32.totalorder %s21, 1
      %p72 = por %p70, %p71
      %p73 = scmp.ne.s32.totalorder %s64, %s65
      %p74 = scmp.eq.s32.totalorder %s21, 0
      %p75 = por %p73, %p74
      %p76 = scmp.ne.s32.totalorder %s64, %s65
      %p77 = scmp.eq.s32.totalorder %s22, 1
      %p78 = por %p76, %p77
      %p80 = scmp.ne.s32.totalorder %s65, %s79
      %p81 = scmp.eq.s32.totalorder %s22, 0
      %p82 = por %p80, %p81
      %s84 = sadd.s32 %s83, 1
      %p87 = scmp.eq.s32.totalorder %s16, 1
      %p88 = scmp.ne.s32.totalorder %s83, %s85
      %p89 = scmp.eq.s32.totalorder %s16, 0
      %p90 = por %p88, %p89
      %p91 = scmp.ne.s32.totalorder %s83, %s85
      %p92 = scmp.eq.s32.totalorder %s21, 1
      %p93 = por %p91, %p92
      %p94 = scmp.ne.s32.totalorder %s85, %s86
      %p95 = scmp.eq.s32.totalorder %s21, 0
      %p96 = por %p94, %p95
      %p97 = scmp.ne.s32.totalorder %s85, %s86
      %p98 = scmp.eq.s32.totalorder %s22, 1
      %p99 = por %p97, %p98
      %p101 = scmp.ne.s32.totalorder %s86, %s100
      %p102 = scmp.eq.s32.totalorder %s22, 0
      %p103 = por %p101, %p102
      %s104 = ssub.s32 %s23, %s35
      %s105 = ssub.s32 %s24, %s31
      %s106 = sor.u32 %s104, %s105
      %p107 = scmp.eq.s32.totalorder %s106, 0
      %s109 = sadd.s32 %s108, 1
      %s110 = scalar_select %p107, %s108, %s109
      %p113 = pneg %p107
      %p114 = scmp.eq.s32.totalorder %s16, 1
      %p115 = por %p113, %p114
      %p116 = scmp.ne.s32.totalorder %s108, %s111
      %p117 = scmp.eq.s32.totalorder %s16, 0
      %p118 = por %p116, %p117
      %p119 = scmp.ne.s32.totalorder %s108, %s111
      %p120 = scmp.eq.s32.totalorder %s21, 1
      %p121 = por %p119, %p120
      %p122 = scmp.ne.s32.totalorder %s111, %s112
      %p123 = scmp.eq.s32.totalorder %s21, 0
      %p124 = por %p122, %p123
      %p125 = scmp.ne.s32.totalorder %s111, %s112
      %p126 = scmp.eq.s32.totalorder %s22, 1
      %p127 = por %p125, %p126
      %p129 = scmp.ne.s32.totalorder %s112, %s128
      %p130 = scmp.eq.s32.totalorder %s22, 0
      %p131 = por %p129, %p130
      %p132 = scmp.le.s32.totalorder 1, %s16
      %p133 = scmp.lt.s32.totalorder %s16, 3
      %p134 = pnand %p132, %p133
      %p135 = pneg %p134
      // Predicated region
      $region9: #{tpu_custom_call.1} parent=5 // pred_check
        _
      $region10: #{tpu_custom_call.1} parent=5 // pred_check_branch
        %137 = sbr.rel (%p134) target = $region12
      $region11: #{tpu_custom_call.1} parent=5 // pred_region
        %s138 = ssub.s32 %s16, 1
        // Predicated region
        $region13: #{tpu_custom_call.1} parent=11 // pred_check
          %p139 = pneg %p75
        $region14: #{tpu_custom_call.1} parent=11 // pred_check_branch
          %141 = sbr.rel (%p139) target = $region16
        $region15: #{tpu_custom_call.1} parent=11 // pred_region
          %s143 = ssub.s32 3072, 3072
          %144 = vsyncadd [#allocation7], %s143
          %s145 = sshll.u32 [#allocation6], 4
          %s146 = int_to_ptr.vmem [resolvable:$true] %s145
          %151 = dma.hbm_to_vmem [thread:$0]  %s1, 3072, %s146, [#allocation7], 192, 192, 12
        $region16: #{tpu_custom_call.1} parent=11 // pred_fallthru
          _
        // Predicated region
        $region17: #{tpu_custom_call.1} parent=11 // pred_check
          %p152 = pneg %p96
        $region18: #{tpu_custom_call.1} parent=11 // pred_check_branch
          %154 = sbr.rel (%p152) target = $region20
        $region19: #{tpu_custom_call.1} parent=11 // pred_region
          %s156 = ssub.s32 1024, 1024
          %157 = vsyncadd [#allocation7], %s156
          %s158 = sshll.u32 [#allocation8], 4
          %s159 = int_to_ptr.vmem [resolvable:$true] %s158
          %164 = dma.hbm_to_vmem [thread:$0]  %s2, 1024, %s159, [#allocation7], 64, 64, 4
        $region20: #{tpu_custom_call.1} parent=11 // pred_fallthru
          _
      $region12: #{tpu_custom_call.1} parent=5 // pred_fallthru
        _
      %p165 = scmp.lt.s32.totalorder %s16, 2
      // Predicated region
      $region21: #{tpu_custom_call.1} parent=5 // pred_check
        %p166 = pneg %p165
      $region22: #{tpu_custom_call.1} parent=5 // pred_check_branch
        %168 = sbr.rel (%p166) target = $region24
      $region23: #{tpu_custom_call.1} parent=5 // pred_region
        // Predicated region
        $region25: #{tpu_custom_call.1} parent=23 // pred_check
          %p169 = pneg %p48
        $region26: #{tpu_custom_call.1} parent=23 // pred_check_branch
          %171 = sbr.rel (%p169) target = $region28
        $region27: #{tpu_custom_call.1} parent=23 // pred_region
          %s172 = sand.u32 %s38, 1
          %s173 = scalar_lea.sflag [#allocation4], %s172
          %s174 = sand.u32 %s38, 1
          %s175 = smul.addr %s174, 8
          %s176 = scalar_lea.vmem [#allocation3], %s175
          %s178 = ssub.s32 128, 128
          %179 = vsyncadd %s173, %s178
          %s180 = smul.addr %s23, 2
          %s181 = smul.addr %s180, 64
          %s182 = scalar_lea.hbm %s0, %s181
          %s183 = sshll.u32 %s176, 4
          %s184 = int_to_ptr.vmem [resolvable:$true] %s183
          %189 = dma.hbm_to_vmem [thread:$0]  %s182, 128, %s184, %s173, 64, 64, 4
        $region28: #{tpu_custom_call.1} parent=23 // pred_fallthru
          _
      $region24: #{tpu_custom_call.1} parent=5 // pred_fallthru
        _
      %p190 = scmp.le.s32.totalorder 1, %s16
      %p191 = scmp.lt.s32.totalorder %s16, 3
      %p192 = pnand %p190, %p191
      %p193 = pneg %p192
      // Predicated region
      $region29: #{tpu_custom_call.1} parent=5 // pred_check
        _
      $region30: #{tpu_custom_call.1} parent=5 // pred_check_branch
        %195 = sbr.rel (%p192) target = $region32
      $region31: #{tpu_custom_call.1} parent=5 // pred_region
        %s196 = ssub.s32 %s16, 1
        %s197 = sand.u32 %s41, 1
        %s198 = scalar_lea.sflag [#allocation4], %s197
        %s199 = sand.u32 %s41, 1
        %s200 = smul.addr %s199, 8
        %s201 = scalar_lea.vmem [#allocation3], %s200
        // Predicated region
        $region33: #{tpu_custom_call.1} parent=31 // pred_check
          %p202 = pneg %p54
        $region34: #{tpu_custom_call.1} parent=31 // pred_check_branch
          %204 = sbr.rel (%p202) target = $region36
        $region35: #{tpu_custom_call.1} parent=31 // pred_region
          %205 = dma.done %s198, 128
        $region36: #{tpu_custom_call.1} parent=31 // pred_fallthru
          _
        // Predicated region
        $region37: #{tpu_custom_call.1} parent=31 // pred_check
          %p206 = pneg %p75
        $region38: #{tpu_custom_call.1} parent=31 // pred_check_branch
          %208 = sbr.rel (%p206) target = $region40
        $region39: #{tpu_custom_call.1} parent=31 // pred_region
          %209 = dma.done [#allocation7], 3072
        $region40: #{tpu_custom_call.1} parent=31 // pred_fallthru
          _
        // Predicated region
        $region41: #{tpu_custom_call.1} parent=31 // pred_check
          %p210 = pneg %p96
        $region42: #{tpu_custom_call.1} parent=31 // pred_check_branch
          %212 = sbr.rel (%p210) target = $region44
        $region43: #{tpu_custom_call.1} parent=31 // pred_region
          %213 = dma.done [#allocation7], 1024
        $region44: #{tpu_custom_call.1} parent=31 // pred_fallthru
          _
        %s214 = sand.u32 %s41, 1
        %s215 = scalar_lea.sflag [#allocation4], %s214
        %s216 = sand.u32 %s41, 1
        %s217 = smul.addr %s216, 8
        %s218 = scalar_lea.vmem [#allocation3], %s217
        %p219 = pneg %p54
        %p220 = pneg %p51
        %p221 = pneg %p75
        %p222 = pneg %p72
        %p223 = pneg %p96
        %p224 = pneg %p93
        %p225 = pneg %p124
        %p226 = pneg %p121
        %s227 = sand.u32 %s111, 1
        %s228 = scalar_lea.sflag [#allocation5], %s227
        %s229 = sand.u32 %s111, 1
        %s230 = smul.addr %s229, 16
        %s231 = scalar_lea.vmem [#allocation9], %s230
        %s232 = smul.u32 2, %s26
        %p234 = scmp.eq.s32.totalorder %s26, 0
        // Predicated region
        $region45: #{tpu_custom_call.1} parent=31 // pred_check
          %p235 = pneg %p234
        $region46: #{tpu_custom_call.1} parent=31 // pred_check_branch
          %237 = sbr.rel (%p235) target = $region48
        $region47: #{tpu_custom_call.1} parent=31 // pred_region
          %v238 = vld [vmem:[%s201] sm:$0xf]
          %v239 = vld [vmem:[%s201 + $0x4] sm:$0xf]
          %v240 = vld [vmem:[#allocation6 + $0x4] sm:$0xff]
          %v241 = vld [vmem:[#allocation6 + $0x10] sm:$0xff]
          %v242 = vld [vmem:[#allocation6 + $0x1c] sm:$0xff]
          %v243 = vld [vmem:[#allocation6 + $0x28] sm:$0xff]
          %v244 = vld [vmem:[#allocation6 + $0x34] sm:$0xff]
          %v245 = vld [vmem:[#allocation6 + $0x40] sm:$0xff]
          %v246 = vld [vmem:[#allocation6 + $0x4c] sm:$0xff]
          %v247 = vld [vmem:[#allocation6 + $0x58] sm:$0xff]
          %v248 = vld [vmem:[#allocation6 + $0x64] sm:$0xff]
          %v249 = vld [vmem:[#allocation6 + $0x70] sm:$0xff]
          %v250 = vld [vmem:[#allocation6 + $0x7c] sm:$0xff]
          %v251 = vld [vmem:[#allocation6 + $0x88] sm:$0xff]
          %v252 = vld [vmem:[#allocation6 + $0x94] sm:$0xff]
          %v253 = vld [vmem:[#allocation6 + $0xa0] sm:$0xff]
          %v254 = vld [vmem:[#allocation6 + $0xac] sm:$0xff]
          %v255 = vld [vmem:[#allocation6 + $0xb8] sm:$0xff]
          %v258 = vunpack.c.l.b16 %v238
          %v259 = vunpack.c.l.b16 %v239
          %v260 = vpack.c.b16 %v259, %v258
          %v278 = vunpack.c.l.b16 %v240
          %v279 = vunpack.c.h.b16 %v240
          %v280 = vunpack.c.l.b16 %v241
          %v281 = vunpack.c.h.b16 %v241
          %v282 = vunpack.c.l.b16 %v242
          %v283 = vunpack.c.h.b16 %v242
          %v284 = vunpack.c.l.b16 %v243
          %v285 = vunpack.c.h.b16 %v243
          %v286 = vunpack.c.l.b16 %v244
          %v287 = vunpack.c.h.b16 %v244
          %v288 = vunpack.c.l.b16 %v245
          %v289 = vunpack.c.h.b16 %v245
          %v290 = vunpack.c.l.b16 %v246
          %v291 = vunpack.c.h.b16 %v246
          %v292 = vunpack.c.l.b16 %v247
          %v293 = vunpack.c.h.b16 %v247
          %v294 = vunpack.c.l.b16 %v248
          %v295 = vunpack.c.h.b16 %v248
          %v296 = vunpack.c.l.b16 %v249
          %v297 = vunpack.c.h.b16 %v249
          %v298 = vunpack.c.l.b16 %v250
          %v299 = vunpack.c.h.b16 %v250
          %v300 = vunpack.c.l.b16 %v251
          %v301 = vunpack.c.h.b16 %v251
          %v302 = vunpack.c.l.b16 %v252
          %v303 = vunpack.c.h.b16 %v252
          %v304 = vunpack.c.l.b16 %v253
          %v305 = vunpack.c.h.b16 %v253
          %v306 = vunpack.c.l.b16 %v254
          %v307 = vunpack.c.h.b16 %v254
          %v308 = vunpack.c.l.b16 %v255
          %v309 = vunpack.c.h.b16 %v255
          %v310 = vpack.c.b16 %v280, %v278
          %v311 = vpack.c.b16 %v281, %v279
          %v312 = vpack.c.b16 %v284, %v282
          %v313 = vpack.c.b16 %v285, %v283
          %v314 = vpack.c.b16 %v288, %v286
          %v315 = vpack.c.b16 %v289, %v287
          %v316 = vpack.c.b16 %v292, %v290
          %v317 = vpack.c.b16 %v293, %v291
          %v318 = vpack.c.b16 %v296, %v294
          %v319 = vpack.c.b16 %v297, %v295
          %v320 = vpack.c.b16 %v300, %v298
          %v321 = vpack.c.b16 %v301, %v299
          %v322 = vpack.c.b16 %v304, %v302
          %v323 = vpack.c.b16 %v305, %v303
          %v324 = vpack.c.b16 %v308, %v306
          %v325 = vpack.c.b16 %v309, %v307
          %342 = vmatprep.subr.bf16.mxu0 %v311
          %343 = vmatpush1.bf16.msra.mxu0 %v310
          %344 = vmatprep.subr.bf16.mxu0 %v313
          %345 = vmatpush1.bf16.msra.mxu0 %v312
          %346 = vmatprep.subr.bf16.mxu0 %v315
          %347 = vmatpush1.bf16.msra.mxu0 %v314
          %348 = vmatprep.subr.bf16.mxu0 %v317
          %349 = vmatpush1.bf16.msra.mxu0 %v316
          %350 = vmatprep.subr.bf16.mxu0 %v319
          %351 = vmatpush1.bf16.msra.mxu0 %v318
          %352 = vmatprep.subr.bf16.mxu0 %v321
          %353 = vmatpush1.bf16.msra.mxu0 %v320
          %354 = vmatprep.subr.bf16.mxu0 %v323
          %355 = vmatpush1.bf16.msra.mxu0 %v322
          %356 = vmatprep.subr.bf16.mxu0 %v325
          %357 = vmatpush1.bf16.msra.mxu0 %v324
          %358 = vmatprep.subr.bf16.mxu0 0
          %359 = vmatpush1.bf16.msra.mxu0 0
          %360 = vmatprep.subr.bf16.mxu0 0
          %361 = vmatpush1.bf16.msra.mxu0 0
          %362 = vmatprep.subr.bf16.mxu0 0
          %363 = vmatpush1.bf16.msra.mxu0 0
          %364 = vmatprep.subr.bf16.mxu0 0
          %365 = vmatpush1.bf16.msra.mxu0 0
          %366 = vmatprep.subr.bf16.mxu0 0
          %367 = vmatpush1.bf16.msra.mxu0 0
          %368 = vmatprep.subr.bf16.mxu0 0
          %369 = vmatpush1.bf16.msra.mxu0 0
          %370 = vmatprep.subr.bf16.mxu0 0
          %371 = vmatpush1.bf16.msra.mxu0 0
          %372 = vmatprep.subr.bf16.mxu0 0
          %373 = vmatpush1.bf16.msra.mxu0 0
          %374 = vmatprep.mubr.bf16.mxu0 0
          %375 = vmatmul.mubr.bf16.gmra.mrb[0].mxu0 %v260
          %v376 = vpop.f32.mrb[0].mxu0
          %v377 = vadd.f32 0.0, %v376
          %v378 = vpop.f32.mrb[0].mxu0
          %v379 = vadd.f32 0.0, %v378
          %v380 = vpop.f32.mrb[0].mxu0
          %v381 = vadd.f32 0.0, %v380
          %v382 = vpop.f32.mrb[0].mxu0
          %v383 = vadd.f32 0.0, %v382
          %384 = vdwg.mxu0
          %v385 = vpack.c.bf16 %v381, %v377
          %v386 = vpack.c.bf16 %v383, %v379
          %387 = vst [vmem:[#allocation2] sm:$0xff] %v385
          %388 = vst [vmem:[#allocation2 + $0x8] sm:$0xff] %v386
        $region48: #{tpu_custom_call.1} parent=31 // pred_fallthru
          _
        %s389 = smul.u32 %s26, 16
        %s390 = sshra.s32 %s389, 3
        %s391 = sand.u32 %s389, 7
        %s392 = smul.addr %s390, 4
        %s393 = scalar_lea.vmem %s201, %s392 [#allocation3]
        %v394 = vld [vmem:[%s393] sm:$0xf]
        %v395 = vld [vmem:[%s393 + $0x4] sm:$0xf]
        %v396 = vld [vmem:[#allocation6] sm:$0xf]
        %v397 = vld [vmem:[#allocation6 + $0xc] sm:$0xf]
        %v398 = vld [vmem:[#allocation6 + $0x18] sm:$0xf]
        %v399 = vld [vmem:[#allocation6 + $0x24] sm:$0xf]
        %v400 = vld [vmem:[#allocation6 + $0x30] sm:$0xf]
        %v401 = vld [vmem:[#allocation6 + $0x3c] sm:$0xf]
        %v402 = vld [vmem:[#allocation6 + $0x48] sm:$0xf]
        %v403 = vld [vmem:[#allocation6 + $0x54] sm:$0xf]
        %v404 = vld [vmem:[#allocation6 + $0x60] sm:$0xf]
        %v405 = vld [vmem:[#allocation6 + $0x6c] sm:$0xf]
        %v406 = vld [vmem:[#allocation6 + $0x78] sm:$0xf]
        %v407 = vld [vmem:[#allocation6 + $0x84] sm:$0xf]
        %v408 = vld [vmem:[#allocation6 + $0x90] sm:$0xf]
        %v409 = vld [vmem:[#allocation6 + $0x9c] sm:$0xf]
        %v410 = vld [vmem:[#allocation6 + $0xa8] sm:$0xf]
        %v411 = vld [vmem:[#allocation6 + $0xb4] sm:$0xf]
        %v414 = vunpack.c.l.b16 %v394
        %v415 = vunpack.c.l.b16 %v395
        %v416 = vpack.c.b16 %v415, %v414
        %v434 = vunpack.c.l.b16 %v396
        %v435 = vunpack.c.l.b16 %v397
        %v436 = vunpack.c.l.b16 %v398
        %v437 = vunpack.c.l.b16 %v399
        %v438 = vunpack.c.l.b16 %v400
        %v439 = vunpack.c.l.b16 %v401
        %v440 = vunpack.c.l.b16 %v402
        %v441 = vunpack.c.l.b16 %v403
        %v442 = vunpack.c.l.b16 %v404
        %v443 = vunpack.c.l.b16 %v405
        %v444 = vunpack.c.l.b16 %v406
        %v445 = vunpack.c.l.b16 %v407
        %v446 = vunpack.c.l.b16 %v408
        %v447 = vunpack.c.l.b16 %v409
        %v448 = vunpack.c.l.b16 %v410
        %v449 = vunpack.c.l.b16 %v411
        %v450 = vpack.c.b16 %v435, %v434
        %v451 = vpack.c.b16 %v437, %v436
        %v452 = vpack.c.b16 %v439, %v438
        %v453 = vpack.c.b16 %v441, %v440
        %v454 = vpack.c.b16 %v443, %v442
        %v455 = vpack.c.b16 %v445, %v444
        %v456 = vpack.c.b16 %v447, %v446
        %v457 = vpack.c.b16 %v449, %v448
        %466 = vmatprep.subr.bf16.mxu0 0
        %467 = vmatpush1.bf16.msra.mxu0 %v450
        %468 = vmatprep.subr.bf16.mxu0 0
        %469 = vmatpush1.bf16.msra.mxu0 %v451
        %470 = vmatprep.subr.bf16.mxu0 0
        %471 = vmatpush1.bf16.msra.mxu0 %v452
        %472 = vmatprep.subr.bf16.mxu0 0
        %473 = vmatpush1.bf16.msra.mxu0 %v453
        %474 = vmatprep.subr.bf16.mxu0 0
        %475 = vmatpush1.bf16.msra.mxu0 %v454
        %476 = vmatprep.subr.bf16.mxu0 0
        %477 = vmatpush1.bf16.msra.mxu0 %v455
        %478 = vmatprep.subr.bf16.mxu0 0
        %479 = vmatpush1.bf16.msra.mxu0 %v456
        %480 = vmatprep.subr.bf16.mxu0 0
        %481 = vmatpush1.bf16.msra.mxu0 %v457
        %482 = vmatprep.subr.bf16.mxu0 0
        %483 = vmatpush1.bf16.msra.mxu0 0
        %484 = vmatprep.subr.bf16.mxu0 0
        %485 = vmatpush1.bf16.msra.mxu0 0
        %486 = vmatprep.subr.bf16.mxu0 0
        %487 = vmatpush1.bf16.msra.mxu0 0
        %488 = vmatprep.subr.bf16.mxu0 0
        %489 = vmatpush1.bf16.msra.mxu0 0
        %490 = vmatprep.subr.bf16.mxu0 0
        %491 = vmatpush1.bf16.msra.mxu0 0
        %492 = vmatprep.subr.bf16.mxu0 0
        %493 = vmatpush1.bf16.msra.mxu0 0
        %494 = vmatprep.subr.bf16.mxu0 0
        %495 = vmatpush1.bf16.msra.mxu0 0
        %496 = vmatprep.subr.bf16.mxu0 0
        %497 = vmatpush1.bf16.msra.mxu0 0
        %498 = vmatprep.mubr.bf16.mxu0 0
        %499 = vmatmul.mubr.bf16.gmra.mrb[0].mxu0 %v416
        %v500 = vpop.f32.mrb[0].mxu0
        %v501 = vadd.f32 0.0, %v500
        %v502 = vpop.f32.mrb[0].mxu0
        %v503 = vpop.f32.mrb[0].mxu0
        %v504 = vadd.f32 0.0, %v503
        %v505 = vpop.f32.mrb[0].mxu0
        %506 = vdwg.mxu0
        %v507 = vpack.c.bf16 %v504, %v501
        %509 = vrot.lane.b32.xlu0 %v507, 112
        %v510 = vpop.permute.xlu0 %509
        %511 = vrot.lane.b32.xlu0 %v507, 96
        %v512 = vpop.permute.xlu0 %511
        %513 = vrot.lane.b32.xlu0 %v507, 80
        %v514 = vpop.permute.xlu0 %513
        %515 = vrot.lane.b32.xlu0 %v507, 64
        %v516 = vpop.permute.xlu0 %515
        %517 = vrot.lane.b32.xlu0 %v507, 48
        %v518 = vpop.permute.xlu0 %517
        %519 = vrot.lane.b32.xlu0 %v507, 32
        %v520 = vpop.permute.xlu0 %519
        %521 = vrot.lane.b32.xlu0 %v507, 16
        %v522 = vpop.permute.xlu0 %521
        %v525 = vpack.i.b16 %v510, %v507
        %v527 = vshrl.u32 %v507, 16
        %v528 = vshrl.u32 %v510, 16
        %v529 = vpack.i.b16 %v528, %v527
        %v533 = vpack.i.b16 %v514, %v512
        %v535 = vshrl.u32 %v512, 16
        %v536 = vshrl.u32 %v514, 16
        %v537 = vpack.i.b16 %v536, %v535
        %v541 = vpack.i.b16 %v518, %v516
        %v543 = vshrl.u32 %v516, 16
        %v544 = vshrl.u32 %v518, 16
        %v545 = vpack.i.b16 %v544, %v543
        %v549 = vpack.i.b16 %v522, %v520
        %v551 = vshrl.u32 %v520, 16
        %v552 = vshrl.u32 %v522, 16
        %v553 = vpack.i.b16 %v552, %v551
        %v555 = vcombine.low %v525, %v541
        %v556 = vcombine.high %v525, %v541
        %v558 = vunpack.c.l.s4 1983009808
        %v559 = vunpack.c.0.s8 %v558
        %v560 = vlaneseq
        %v561 = vshrl.u32 %v560, 7
        %v562 = vsub.s32 %v559, %v561
        %v563 = vrot.slane %v555, %v562
        %v565 = vunpack.c.l.s4 1983009808
        %v566 = vunpack.c.0.s8 %v565
        %v567 = vlaneseq
        %v568 = vshrl.u32 %v567, 7
        %v569 = vsub.s32 %v566, %v568
        %v570 = vrot.slane %v556, %v569
        %v571 = vcombine.low %v533, %v549
        %v572 = vcombine.high %v533, %v549
        %v574 = vunpack.c.l.s4 1983009808
        %v575 = vunpack.c.0.s8 %v574
        %v576 = vlaneseq
        %v577 = vshrl.u32 %v576, 7
        %v578 = vsub.s32 %v575, %v577
        %v579 = vrot.slane %v571, %v578
        %v581 = vunpack.c.l.s4 1983009808
        %v582 = vunpack.c.0.s8 %v581
        %v583 = vlaneseq
        %v584 = vshrl.u32 %v583, 7
        %v585 = vsub.s32 %v582, %v584
        %v586 = vrot.slane %v572, %v585
        %v587 = vcombine.low %v563, %v579
        %v588 = vcombine.high %v563, %v579
        %v590 = vunpack.c.l.s4 1934713408
        %v591 = vunpack.c.0.s8 %v590
        %v592 = vlaneseq
        %v593 = vshrl.u32 %v592, 7
        %v594 = vsub.s32 %v591, %v593
        %v595 = vrot.slane %v587, %v594
        %v597 = vunpack.c.l.s4 1934713408
        %v598 = vunpack.c.0.s8 %v597
        %v599 = vlaneseq
        %v600 = vshrl.u32 %v599, 7
        %v601 = vsub.s32 %v598, %v600
        %v602 = vrot.slane %v588, %v601
        %v603 = vcombine.low %v570, %v586
        %v604 = vcombine.high %v570, %v586
        %v606 = vunpack.c.l.s4 1934713408
        %v607 = vunpack.c.0.s8 %v606
        %v608 = vlaneseq
        %v609 = vshrl.u32 %v608, 7
        %v610 = vsub.s32 %v607, %v609
        %v611 = vrot.slane %v603, %v610
        %v613 = vunpack.c.l.s4 1934713408
        %v614 = vunpack.c.0.s8 %v613
        %v615 = vlaneseq
        %v616 = vshrl.u32 %v615, 7
        %v617 = vsub.s32 %v614, %v616
        %v618 = vrot.slane %v604, %v617
        %v619 = vcombine.high %v595, 0
        %v620 = vcombine.high %v602, 0
        %v621 = vcombine.high %v611, 0
        %v622 = vcombine.high %v618, 0
        %v623 = vcombine.low %v529, %v545
        %v624 = vcombine.high %v529, %v545
        %v626 = vunpack.c.l.s4 1983009808
        %v627 = vunpack.c.0.s8 %v626
        %v628 = vlaneseq
        %v629 = vshrl.u32 %v628, 7
        %v630 = vsub.s32 %v627, %v629
        %v631 = vrot.slane %v623, %v630
        %v633 = vunpack.c.l.s4 1983009808
        %v634 = vunpack.c.0.s8 %v633
        %v635 = vlaneseq
        %v636 = vshrl.u32 %v635, 7
        %v637 = vsub.s32 %v634, %v636
        %v638 = vrot.slane %v624, %v637
        %v639 = vcombine.low %v537, %v553
        %v640 = vcombine.high %v537, %v553
        %v642 = vunpack.c.l.s4 1983009808
        %v643 = vunpack.c.0.s8 %v642
        %v644 = vlaneseq
        %v645 = vshrl.u32 %v644, 7
        %v646 = vsub.s32 %v643, %v645
        %v647 = vrot.slane %v639, %v646
        %v649 = vunpack.c.l.s4 1983009808
        %v650 = vunpack.c.0.s8 %v649
        %v651 = vlaneseq
        %v652 = vshrl.u32 %v651, 7
        %v653 = vsub.s32 %v650, %v652
        %v654 = vrot.slane %v640, %v653
        %v655 = vcombine.low %v631, %v647
        %v656 = vcombine.high %v631, %v647
        %v658 = vunpack.c.l.s4 1934713408
        %v659 = vunpack.c.0.s8 %v658
        %v660 = vlaneseq
        %v661 = vshrl.u32 %v660, 7
        %v662 = vsub.s32 %v659, %v661
        %v663 = vrot.slane %v655, %v662
        %v665 = vunpack.c.l.s4 1934713408
        %v666 = vunpack.c.0.s8 %v665
        %v667 = vlaneseq
        %v668 = vshrl.u32 %v667, 7
        %v669 = vsub.s32 %v666, %v668
        %v670 = vrot.slane %v656, %v669
        %v671 = vcombine.low %v638, %v654
        %v672 = vcombine.high %v638, %v654
        %v674 = vunpack.c.l.s4 1934713408
        %v675 = vunpack.c.0.s8 %v674
        %v676 = vlaneseq
        %v677 = vshrl.u32 %v676, 7
        %v678 = vsub.s32 %v675, %v677
        %v679 = vrot.slane %v671, %v678
        %v681 = vunpack.c.l.s4 1934713408
        %v682 = vunpack.c.0.s8 %v681
        %v683 = vlaneseq
        %v684 = vshrl.u32 %v683, 7
        %v685 = vsub.s32 %v682, %v684
        %v686 = vrot.slane %v672, %v685
        %v687 = vcombine.high %v663, 0
        %v688 = vcombine.high %v670, 0
        %v689 = vcombine.high %v679, 0
        %v690 = vcombine.high %v686, 0
        %v691 = vcombine.low %v595, %v602
        %v693 = vunpack.c.l.s4 1983009808
        %v694 = vunpack.c.0.s8 %v693
        %v695 = vlaneseq
        %v696 = vshrl.u32 %v695, 7
        %v697 = vsub.s32 %v694, %v696
        %v698 = vrot.slane %v691, %v697
        %v699 = vcombine.low %v619, %v620
        %v701 = vunpack.c.l.s4 1983009808
        %v702 = vunpack.c.0.s8 %v701
        %v703 = vlaneseq
        %v704 = vshrl.u32 %v703, 7
        %v705 = vsub.s32 %v702, %v704
        %v706 = vrot.slane %v699, %v705
        %v707 = vcombine.low %v611, %v618
        %v709 = vunpack.c.l.s4 1983009808
        %v710 = vunpack.c.0.s8 %v709
        %v711 = vlaneseq
        %v712 = vshrl.u32 %v711, 7
        %v713 = vsub.s32 %v710, %v712
        %v714 = vrot.slane %v707, %v713
        %v715 = vcombine.low %v621, %v622
        %v717 = vunpack.c.l.s4 1983009808
        %v718 = vunpack.c.0.s8 %v717
        %v719 = vlaneseq
        %v720 = vshrl.u32 %v719, 7
        %v721 = vsub.s32 %v718, %v720
        %v722 = vrot.slane %v715, %v721
        %v723 = vcombine.low %v698, %v706
        %v724 = vcombine.high %v698, %v706
        %v726 = vunpack.c.l.s4 1934713408
        %v727 = vunpack.c.0.s8 %v726
        %v728 = vlaneseq
        %v729 = vshrl.u32 %v728, 7
        %v730 = vsub.s32 %v727, %v729
        %v731 = vrot.slane %v723, %v730
        %v733 = vunpack.c.l.s4 1934713408
        %v734 = vunpack.c.0.s8 %v733
        %v735 = vlaneseq
        %v736 = vshrl.u32 %v735, 7
        %v737 = vsub.s32 %v734, %v736
        %v738 = vrot.slane %v724, %v737
        %v739 = vcombine.low %v714, %v722
        %v740 = vcombine.high %v714, %v722
        %v742 = vunpack.c.l.s4 1934713408
        %v743 = vunpack.c.0.s8 %v742
        %v744 = vlaneseq
        %v745 = vshrl.u32 %v744, 7
        %v746 = vsub.s32 %v743, %v745
        %v747 = vrot.slane %v739, %v746
        %v749 = vunpack.c.l.s4 1934713408
        %v750 = vunpack.c.0.s8 %v749
        %v751 = vlaneseq
        %v752 = vshrl.u32 %v751, 7
        %v753 = vsub.s32 %v750, %v752
        %v754 = vrot.slane %v740, %v753
        %v755 = vcombine.low %v731, %v747
        %v756 = vcombine.high %v731, %v747
        %v757 = vcombine.low %v738, %v754
        %v758 = vcombine.high %v738, %v754
        %v759 = vcombine.low %v663, %v670
        %v761 = vunpack.c.l.s4 1983009808
        %v762 = vunpack.c.0.s8 %v761
        %v763 = vlaneseq
        %v764 = vshrl.u32 %v763, 7
        %v765 = vsub.s32 %v762, %v764
        %v766 = vrot.slane %v759, %v765
        %v767 = vcombine.low %v687, %v688
        %v769 = vunpack.c.l.s4 1983009808
        %v770 = vunpack.c.0.s8 %v769
        %v771 = vlaneseq
        %v772 = vshrl.u32 %v771, 7
        %v773 = vsub.s32 %v770, %v772
        %v774 = vrot.slane %v767, %v773
        %v775 = vcombine.low %v679, %v686
        %v777 = vunpack.c.l.s4 1983009808
        %v778 = vunpack.c.0.s8 %v777
        %v779 = vlaneseq
        %v780 = vshrl.u32 %v779, 7
        %v781 = vsub.s32 %v778, %v780
        %v782 = vrot.slane %v775, %v781
        %v783 = vcombine.low %v689, %v690
        %v785 = vunpack.c.l.s4 1983009808
        %v786 = vunpack.c.0.s8 %v785
        %v787 = vlaneseq
        %v788 = vshrl.u32 %v787, 7
        %v789 = vsub.s32 %v786, %v788
        %v790 = vrot.slane %v783, %v789
        %v791 = vcombine.low %v766, %v774
        %v792 = vcombine.high %v766, %v774
        %v794 = vunpack.c.l.s4 1934713408
        %v795 = vunpack.c.0.s8 %v794
        %v796 = vlaneseq
        %v797 = vshrl.u32 %v796, 7
        %v798 = vsub.s32 %v795, %v797
        %v799 = vrot.slane %v791, %v798
        %v801 = vunpack.c.l.s4 1934713408
        %v802 = vunpack.c.0.s8 %v801
        %v803 = vlaneseq
        %v804 = vshrl.u32 %v803, 7
        %v805 = vsub.s32 %v802, %v804
        %v806 = vrot.slane %v792, %v805
        %v807 = vcombine.low %v782, %v790
        %v808 = vcombine.high %v782, %v790
        %v810 = vunpack.c.l.s4 1934713408
        %v811 = vunpack.c.0.s8 %v810
        %v812 = vlaneseq
        %v813 = vshrl.u32 %v812, 7
        %v814 = vsub.s32 %v811, %v813
        %v815 = vrot.slane %v807, %v814
        %v817 = vunpack.c.l.s4 1934713408
        %v818 = vunpack.c.0.s8 %v817
        %v819 = vlaneseq
        %v820 = vshrl.u32 %v819, 7
        %v821 = vsub.s32 %v818, %v820
        %v822 = vrot.slane %v808, %v821
        %v823 = vcombine.low %v799, %v815
        %v824 = vcombine.high %v799, %v815
        %v825 = vcombine.low %v806, %v822
        %v826 = vcombine.high %v806, %v822
        %v829 = vpack.i.b16 %v823, %v755
        %v830 = vshrl.u32 %v755, 16
        %v831 = vshrl.u32 %v823, 16
        %v832 = vpack.i.b16 %v831, %v830
        %v835 = vpack.i.b16 %v824, %v756
        %v836 = vshrl.u32 %v756, 16
        %v837 = vshrl.u32 %v824, 16
        %v838 = vpack.i.b16 %v837, %v836
        %v841 = vpack.i.b16 %v825, %v757
        %v842 = vshrl.u32 %v757, 16
        %v843 = vshrl.u32 %v825, 16
        %v844 = vpack.i.b16 %v843, %v842
        %v847 = vpack.i.b16 %v826, %v758
        %v848 = vshrl.u32 %v758, 16
        %v849 = vshrl.u32 %v826, 16
        %v850 = vpack.i.b16 %v849, %v848
        %v851 = vld [vmem:[#allocation2] sm:$0xff]
        %v852 = vld [vmem:[#allocation2 + $0x8] sm:$0xff]
        %854 = vrot.lane.b32.xlu0 %v851, 112
        %v855 = vpop.permute.xlu0 %854
        %856 = vrot.lane.b32.xlu0 %v851, 96
        %v857 = vpop.permute.xlu0 %856
        %858 = vrot.lane.b32.xlu0 %v851, 80
        %v859 = vpop.permute.xlu0 %858
        %860 = vrot.lane.b32.xlu0 %v851, 64
        %v861 = vpop.permute.xlu0 %860
        %862 = vrot.lane.b32.xlu0 %v851, 48
        %v863 = vpop.permute.xlu0 %862
        %864 = vrot.lane.b32.xlu0 %v851, 32
        %v865 = vpop.permute.xlu0 %864
        %866 = vrot.lane.b32.xlu0 %v851, 16
        %v867 = vpop.permute.xlu0 %866
        %v870 = vpack.i.b16 %v855, %v851
        %v872 = vshrl.u32 %v851, 16
        %v873 = vshrl.u32 %v855, 16
        %v874 = vpack.i.b16 %v873, %v872
        %v878 = vpack.i.b16 %v859, %v857
        %v880 = vshrl.u32 %v857, 16
        %v881 = vshrl.u32 %v859, 16
        %v882 = vpack.i.b16 %v881, %v880
        %v886 = vpack.i.b16 %v863, %v861
        %v888 = vshrl.u32 %v861, 16
        %v889 = vshrl.u32 %v863, 16
        %v890 = vpack.i.b16 %v889, %v888
        %v894 = vpack.i.b16 %v867, %v865
        %v896 = vshrl.u32 %v865, 16
        %v897 = vshrl.u32 %v867, 16
        %v898 = vpack.i.b16 %v897, %v896
        %v900 = vcombine.low %v870, %v886
        %v901 = vcombine.high %v870, %v886
        %v903 = vunpack.c.l.s4 1983009808
        %v904 = vunpack.c.0.s8 %v903
        %v905 = vlaneseq
        %v906 = vshrl.u32 %v905, 7
        %v907 = vsub.s32 %v904, %v906
        %v908 = vrot.slane %v900, %v907
        %v910 = vunpack.c.l.s4 1983009808
        %v911 = vunpack.c.0.s8 %v910
        %v912 = vlaneseq
        %v913 = vshrl.u32 %v912, 7
        %v914 = vsub.s32 %v911, %v913
        %v915 = vrot.slane %v901, %v914
        %v916 = vcombine.low %v878, %v894
        %v917 = vcombine.high %v878, %v894
        %v919 = vunpack.c.l.s4 1983009808
        %v920 = vunpack.c.0.s8 %v919
        %v921 = vlaneseq
        %v922 = vshrl.u32 %v921, 7
        %v923 = vsub.s32 %v920, %v922
        %v924 = vrot.slane %v916, %v923
        %v926 = vunpack.c.l.s4 1983009808
        %v927 = vunpack.c.0.s8 %v926
        %v928 = vlaneseq
        %v929 = vshrl.u32 %v928, 7
        %v930 = vsub.s32 %v927, %v929
        %v931 = vrot.slane %v917, %v930
        %v932 = vcombine.low %v908, %v924
        %v933 = vcombine.high %v908, %v924
        %v935 = vunpack.c.l.s4 1934713408
        %v936 = vunpack.c.0.s8 %v935
        %v937 = vlaneseq
        %v938 = vshrl.u32 %v937, 7
        %v939 = vsub.s32 %v936, %v938
        %v940 = vrot.slane %v932, %v939
        %v942 = vunpack.c.l.s4 1934713408
        %v943 = vunpack.c.0.s8 %v942
        %v944 = vlaneseq
        %v945 = vshrl.u32 %v944, 7
        %v946 = vsub.s32 %v943, %v945
        %v947 = vrot.slane %v933, %v946
        %v948 = vcombine.low %v915, %v931
        %v949 = vcombine.high %v915, %v931
        %v951 = vunpack.c.l.s4 1934713408
        %v952 = vunpack.c.0.s8 %v951
        %v953 = vlaneseq
        %v954 = vshrl.u32 %v953, 7
        %v955 = vsub.s32 %v952, %v954
        %v956 = vrot.slane %v948, %v955
        %v958 = vunpack.c.l.s4 1934713408
        %v959 = vunpack.c.0.s8 %v958
        %v960 = vlaneseq
        %v961 = vshrl.u32 %v960, 7
        %v962 = vsub.s32 %v959, %v961
        %v963 = vrot.slane %v949, %v962
        %v964 = vcombine.high %v940, 0
        %v965 = vcombine.high %v947, 0
        %v966 = vcombine.high %v956, 0
        %v967 = vcombine.high %v963, 0
        %v968 = vcombine.low %v874, %v890
        %v969 = vcombine.high %v874, %v890
        %v971 = vunpack.c.l.s4 1983009808
        %v972 = vunpack.c.0.s8 %v971
        %v973 = vlaneseq
        %v974 = vshrl.u32 %v973, 7
        %v975 = vsub.s32 %v972, %v974
        %v976 = vrot.slane %v968, %v975
        %v978 = vunpack.c.l.s4 1983009808
        %v979 = vunpack.c.0.s8 %v978
        %v980 = vlaneseq
        %v981 = vshrl.u32 %v980, 7
        %v982 = vsub.s32 %v979, %v981
        %v983 = vrot.slane %v969, %v982
        %v984 = vcombine.low %v882, %v898
        %v985 = vcombine.high %v882, %v898
        %v987 = vunpack.c.l.s4 1983009808
        %v988 = vunpack.c.0.s8 %v987
        %v989 = vlaneseq
        %v990 = vshrl.u32 %v989, 7
        %v991 = vsub.s32 %v988, %v990
        %v992 = vrot.slane %v984, %v991
        %v994 = vunpack.c.l.s4 1983009808
        %v995 = vunpack.c.0.s8 %v994
        %v996 = vlaneseq
        %v997 = vshrl.u32 %v996, 7
        %v998 = vsub.s32 %v995, %v997
        %v999 = vrot.slane %v985, %v998
        %v1000 = vcombine.low %v976, %v992
        %v1001 = vcombine.high %v976, %v992
        %v1003 = vunpack.c.l.s4 1934713408
        %v1004 = vunpack.c.0.s8 %v1003
        %v1005 = vlaneseq
        %v1006 = vshrl.u32 %v1005, 7
        %v1007 = vsub.s32 %v1004, %v1006
        %v1008 = vrot.slane %v1000, %v1007
        %v1010 = vunpack.c.l.s4 1934713408
        %v1011 = vunpack.c.0.s8 %v1010
        %v1012 = vlaneseq
        %v1013 = vshrl.u32 %v1012, 7
        %v1014 = vsub.s32 %v1011, %v1013
        %v1015 = vrot.slane %v1001, %v1014
        %v1016 = vcombine.low %v983, %v999
        %v1017 = vcombine.high %v983, %v999
        %v1019 = vunpack.c.l.s4 1934713408
        %v1020 = vunpack.c.0.s8 %v1019
        %v1021 = vlaneseq
        %v1022 = vshrl.u32 %v1021, 7
        %v1023 = vsub.s32 %v1020, %v1022
        %v1024 = vrot.slane %v1016, %v1023
        %v1026 = vunpack.c.l.s4 1934713408
        %v1027 = vunpack.c.0.s8 %v1026
        %v1028 = vlaneseq
        %v1029 = vshrl.u32 %v1028, 7
        %v1030 = vsub.s32 %v1027, %v1029
        %v1031 = vrot.slane %v1017, %v1030
        %v1032 = vcombine.high %v1008, 0
        %v1033 = vcombine.high %v1015, 0
        %v1034 = vcombine.high %v1024, 0
        %v1035 = vcombine.high %v1031, 0
        %v1036 = vcombine.low %v940, %v947
        %v1038 = vunpack.c.l.s4 1983009808
        %v1039 = vunpack.c.0.s8 %v1038
        %v1040 = vlaneseq
        %v1041 = vshrl.u32 %v1040, 7
        %v1042 = vsub.s32 %v1039, %v1041
        %v1043 = vrot.slane %v1036, %v1042
        %v1044 = vcombine.low %v964, %v965
        %v1046 = vunpack.c.l.s4 1983009808
        %v1047 = vunpack.c.0.s8 %v1046
        %v1048 = vlaneseq
        %v1049 = vshrl.u32 %v1048, 7
        %v1050 = vsub.s32 %v1047, %v1049
        %v1051 = vrot.slane %v1044, %v1050
        %v1052 = vcombine.low %v956, %v963
        %v1054 = vunpack.c.l.s4 1983009808
        %v1055 = vunpack.c.0.s8 %v1054
        %v1056 = vlaneseq
        %v1057 = vshrl.u32 %v1056, 7
        %v1058 = vsub.s32 %v1055, %v1057
        %v1059 = vrot.slane %v1052, %v1058
        %v1060 = vcombine.low %v966, %v967
        %v1062 = vunpack.c.l.s4 1983009808
        %v1063 = vunpack.c.0.s8 %v1062
        %v1064 = vlaneseq
        %v1065 = vshrl.u32 %v1064, 7
        %v1066 = vsub.s32 %v1063, %v1065
        %v1067 = vrot.slane %v1060, %v1066
        %v1068 = vcombine.low %v1043, %v1051
        %v1069 = vcombine.high %v1043, %v1051
        %v1071 = vunpack.c.l.s4 1934713408
        %v1072 = vunpack.c.0.s8 %v1071
        %v1073 = vlaneseq
        %v1074 = vshrl.u32 %v1073, 7
        %v1075 = vsub.s32 %v1072, %v1074
        %v1076 = vrot.slane %v1068, %v1075
        %v1078 = vunpack.c.l.s4 1934713408
        %v1079 = vunpack.c.0.s8 %v1078
        %v1080 = vlaneseq
        %v1081 = vshrl.u32 %v1080, 7
        %v1082 = vsub.s32 %v1079, %v1081
        %v1083 = vrot.slane %v1069, %v1082
        %v1084 = vcombine.low %v1059, %v1067
        %v1085 = vcombine.high %v1059, %v1067
        %v1087 = vunpack.c.l.s4 1934713408
        %v1088 = vunpack.c.0.s8 %v1087
        %v1089 = vlaneseq
        %v1090 = vshrl.u32 %v1089, 7
        %v1091 = vsub.s32 %v1088, %v1090
        %v1092 = vrot.slane %v1084, %v1091
        %v1094 = vunpack.c.l.s4 1934713408
        %v1095 = vunpack.c.0.s8 %v1094
        %v1096 = vlaneseq
        %v1097 = vshrl.u32 %v1096, 7
        %v1098 = vsub.s32 %v1095, %v1097
        %v1099 = vrot.slane %v1085, %v1098
        %v1100 = vcombine.low %v1076, %v1092
        %v1101 = vcombine.high %v1076, %v1092
        %v1102 = vcombine.low %v1083, %v1099
        %v1103 = vcombine.high %v1083, %v1099
        %v1104 = vcombine.low %v1008, %v1015
        %v1106 = vunpack.c.l.s4 1983009808
        %v1107 = vunpack.c.0.s8 %v1106
        %v1108 = vlaneseq
        %v1109 = vshrl.u32 %v1108, 7
        %v1110 = vsub.s32 %v1107, %v1109
        %v1111 = vrot.slane %v1104, %v1110
        %v1112 = vcombine.low %v1032, %v1033
        %v1114 = vunpack.c.l.s4 1983009808
        %v1115 = vunpack.c.0.s8 %v1114
        %v1116 = vlaneseq
        %v1117 = vshrl.u32 %v1116, 7
        %v1118 = vsub.s32 %v1115, %v1117
        %v1119 = vrot.slane %v1112, %v1118
        %v1120 = vcombine.low %v1024, %v1031
        %v1122 = vunpack.c.l.s4 1983009808
        %v1123 = vunpack.c.0.s8 %v1122
        %v1124 = vlaneseq
        %v1125 = vshrl.u32 %v1124, 7
        %v1126 = vsub.s32 %v1123, %v1125
        %v1127 = vrot.slane %v1120, %v1126
        %v1128 = vcombine.low %v1034, %v1035
        %v1130 = vunpack.c.l.s4 1983009808
        %v1131 = vunpack.c.0.s8 %v1130
        %v1132 = vlaneseq
        %v1133 = vshrl.u32 %v1132, 7
        %v1134 = vsub.s32 %v1131, %v1133
        %v1135 = vrot.slane %v1128, %v1134
        %v1136 = vcombine.low %v1111, %v1119
        %v1137 = vcombine.high %v1111, %v1119
        %v1139 = vunpack.c.l.s4 1934713408
        %v1140 = vunpack.c.0.s8 %v1139
        %v1141 = vlaneseq
        %v1142 = vshrl.u32 %v1141, 7
        %v1143 = vsub.s32 %v1140, %v1142
        %v1144 = vrot.slane %v1136, %v1143
        %v1146 = vunpack.c.l.s4 1934713408
        %v1147 = vunpack.c.0.s8 %v1146
        %v1148 = vlaneseq
        %v1149 = vshrl.u32 %v1148, 7
        %v1150 = vsub.s32 %v1147, %v1149
        %v1151 = vrot.slane %v1137, %v1150
        %v1152 = vcombine.low %v1127, %v1135
        %v1153 = vcombine.high %v1127, %v1135
        %v1155 = vunpack.c.l.s4 1934713408
        %v1156 = vunpack.c.0.s8 %v1155
        %v1157 = vlaneseq
        %v1158 = vshrl.u32 %v1157, 7
        %v1159 = vsub.s32 %v1156, %v1158
        %v1160 = vrot.slane %v1152, %v1159
        %v1162 = vunpack.c.l.s4 1934713408
        %v1163 = vunpack.c.0.s8 %v1162
        %v1164 = vlaneseq
        %v1165 = vshrl.u32 %v1164, 7
        %v1166 = vsub.s32 %v1163, %v1165
        %v1167 = vrot.slane %v1153, %v1166
        %v1168 = vcombine.low %v1144, %v1160
        %v1169 = vcombine.high %v1144, %v1160
        %v1170 = vcombine.low %v1151, %v1167
        %v1171 = vcombine.high %v1151, %v1167
        %v1174 = vpack.i.b16 %v1168, %v1100
        %v1175 = vshrl.u32 %v1100, 16
        %v1176 = vshrl.u32 %v1168, 16
        %v1177 = vpack.i.b16 %v1176, %v1175
        %v1180 = vpack.i.b16 %v1169, %v1101
        %v1181 = vshrl.u32 %v1101, 16
        %v1182 = vshrl.u32 %v1169, 16
        %v1183 = vpack.i.b16 %v1182, %v1181
        %v1186 = vpack.i.b16 %v1170, %v1102
        %v1187 = vshrl.u32 %v1102, 16
        %v1188 = vshrl.u32 %v1170, 16
        %v1189 = vpack.i.b16 %v1188, %v1187
        %v1192 = vpack.i.b16 %v1171, %v1103
        %v1193 = vshrl.u32 %v1103, 16
        %v1194 = vshrl.u32 %v1171, 16
        %v1195 = vpack.i.b16 %v1194, %v1193
        %1197 = vrot.lane.b32.xlu0 %v852, 112
        %v1198 = vpop.permute.xlu0 %1197
        %1199 = vrot.lane.b32.xlu0 %v852, 96
        %v1200 = vpop.permute.xlu0 %1199
        %1201 = vrot.lane.b32.xlu0 %v852, 80
        %v1202 = vpop.permute.xlu0 %1201
        %1203 = vrot.lane.b32.xlu0 %v852, 64
        %v1204 = vpop.permute.xlu0 %1203
        %1205 = vrot.lane.b32.xlu0 %v852, 48
        %v1206 = vpop.permute.xlu0 %1205
        %1207 = vrot.lane.b32.xlu0 %v852, 32
        %v1208 = vpop.permute.xlu0 %1207
        %1209 = vrot.lane.b32.xlu0 %v852, 16
        %v1210 = vpop.permute.xlu0 %1209
        %v1213 = vpack.i.b16 %v1198, %v852
        %v1215 = vshrl.u32 %v852, 16
        %v1216 = vshrl.u32 %v1198, 16
        %v1217 = vpack.i.b16 %v1216, %v1215
        %v1221 = vpack.i.b16 %v1202, %v1200
        %v1223 = vshrl.u32 %v1200, 16
        %v1224 = vshrl.u32 %v1202, 16
        %v1225 = vpack.i.b16 %v1224, %v1223
        %v1229 = vpack.i.b16 %v1206, %v1204
        %v1231 = vshrl.u32 %v1204, 16
        %v1232 = vshrl.u32 %v1206, 16
        %v1233 = vpack.i.b16 %v1232, %v1231
        %v1237 = vpack.i.b16 %v1210, %v1208
        %v1239 = vshrl.u32 %v1208, 16
        %v1240 = vshrl.u32 %v1210, 16
        %v1241 = vpack.i.b16 %v1240, %v1239
        %v1243 = vcombine.low %v1213, %v1229
        %v1244 = vcombine.high %v1213, %v1229
        %v1246 = vunpack.c.l.s4 1983009808
        %v1247 = vunpack.c.0.s8 %v1246
        %v1248 = vlaneseq
        %v1249 = vshrl.u32 %v1248, 7
        %v1250 = vsub.s32 %v1247, %v1249
        %v1251 = vrot.slane %v1243, %v1250
        %v1253 = vunpack.c.l.s4 1983009808
        %v1254 = vunpack.c.0.s8 %v1253
        %v1255 = vlaneseq
        %v1256 = vshrl.u32 %v1255, 7
        %v1257 = vsub.s32 %v1254, %v1256
        %v1258 = vrot.slane %v1244, %v1257
        %v1259 = vcombine.low %v1221, %v1237
        %v1260 = vcombine.high %v1221, %v1237
        %v1262 = vunpack.c.l.s4 1983009808
        %v1263 = vunpack.c.0.s8 %v1262
        %v1264 = vlaneseq
        %v1265 = vshrl.u32 %v1264, 7
        %v1266 = vsub.s32 %v1263, %v1265
        %v1267 = vrot.slane %v1259, %v1266
        %v1269 = vunpack.c.l.s4 1983009808
        %v1270 = vunpack.c.0.s8 %v1269
        %v1271 = vlaneseq
        %v1272 = vshrl.u32 %v1271, 7
        %v1273 = vsub.s32 %v1270, %v1272
        %v1274 = vrot.slane %v1260, %v1273
        %v1275 = vcombine.low %v1251, %v1267
        %v1276 = vcombine.high %v1251, %v1267
        %v1278 = vunpack.c.l.s4 1934713408
        %v1279 = vunpack.c.0.s8 %v1278
        %v1280 = vlaneseq
        %v1281 = vshrl.u32 %v1280, 7
        %v1282 = vsub.s32 %v1279, %v1281
        %v1283 = vrot.slane %v1275, %v1282
        %v1285 = vunpack.c.l.s4 1934713408
        %v1286 = vunpack.c.0.s8 %v1285
        %v1287 = vlaneseq
        %v1288 = vshrl.u32 %v1287, 7
        %v1289 = vsub.s32 %v1286, %v1288
        %v1290 = vrot.slane %v1276, %v1289
        %v1291 = vcombine.low %v1258, %v1274
        %v1292 = vcombine.high %v1258, %v1274
        %v1294 = vunpack.c.l.s4 1934713408
        %v1295 = vunpack.c.0.s8 %v1294
        %v1296 = vlaneseq
        %v1297 = vshrl.u32 %v1296, 7
        %v1298 = vsub.s32 %v1295, %v1297
        %v1299 = vrot.slane %v1291, %v1298
        %v1301 = vunpack.c.l.s4 1934713408
        %v1302 = vunpack.c.0.s8 %v1301
        %v1303 = vlaneseq
        %v1304 = vshrl.u32 %v1303, 7
        %v1305 = vsub.s32 %v1302, %v1304
        %v1306 = vrot.slane %v1292, %v1305
        %v1307 = vcombine.high %v1283, 0
        %v1308 = vcombine.high %v1290, 0
        %v1309 = vcombine.high %v1299, 0
        %v1310 = vcombine.high %v1306, 0
        %v1311 = vcombine.low %v1217, %v1233
        %v1312 = vcombine.high %v1217, %v1233
        %v1314 = vunpack.c.l.s4 1983009808
        %v1315 = vunpack.c.0.s8 %v1314
        %v1316 = vlaneseq
        %v1317 = vshrl.u32 %v1316, 7
        %v1318 = vsub.s32 %v1315, %v1317
        %v1319 = vrot.slane %v1311, %v1318
        %v1321 = vunpack.c.l.s4 1983009808
        %v1322 = vunpack.c.0.s8 %v1321
        %v1323 = vlaneseq
        %v1324 = vshrl.u32 %v1323, 7
        %v1325 = vsub.s32 %v1322, %v1324
        %v1326 = vrot.slane %v1312, %v1325
        %v1327 = vcombine.low %v1225, %v1241
        %v1328 = vcombine.high %v1225, %v1241
        %v1330 = vunpack.c.l.s4 1983009808
        %v1331 = vunpack.c.0.s8 %v1330
        %v1332 = vlaneseq
        %v1333 = vshrl.u32 %v1332, 7
        %v1334 = vsub.s32 %v1331, %v1333
        %v1335 = vrot.slane %v1327, %v1334
        %v1337 = vunpack.c.l.s4 1983009808
        %v1338 = vunpack.c.0.s8 %v1337
        %v1339 = vlaneseq
        %v1340 = vshrl.u32 %v1339, 7
        %v1341 = vsub.s32 %v1338, %v1340
        %v1342 = vrot.slane %v1328, %v1341
        %v1343 = vcombine.low %v1319, %v1335
        %v1344 = vcombine.high %v1319, %v1335
        %v1346 = vunpack.c.l.s4 1934713408
        %v1347 = vunpack.c.0.s8 %v1346
        %v1348 = vlaneseq
        %v1349 = vshrl.u32 %v1348, 7
        %v1350 = vsub.s32 %v1347, %v1349
        %v1351 = vrot.slane %v1343, %v1350
        %v1353 = vunpack.c.l.s4 1934713408
        %v1354 = vunpack.c.0.s8 %v1353
        %v1355 = vlaneseq
        %v1356 = vshrl.u32 %v1355, 7
        %v1357 = vsub.s32 %v1354, %v1356
        %v1358 = vrot.slane %v1344, %v1357
        %v1359 = vcombine.low %v1326, %v1342
        %v1360 = vcombine.high %v1326, %v1342
        %v1362 = vunpack.c.l.s4 1934713408
        %v1363 = vunpack.c.0.s8 %v1362
        %v1364 = vlaneseq
        %v1365 = vshrl.u32 %v1364, 7
        %v1366 = vsub.s32 %v1363, %v1365
        %v1367 = vrot.slane %v1359, %v1366
        %v1369 = vunpack.c.l.s4 1934713408
        %v1370 = vunpack.c.0.s8 %v1369
        %v1371 = vlaneseq
        %v1372 = vshrl.u32 %v1371, 7
        %v1373 = vsub.s32 %v1370, %v1372
        %v1374 = vrot.slane %v1360, %v1373
        %v1375 = vcombine.high %v1351, 0
        %v1376 = vcombine.high %v1358, 0
        %v1377 = vcombine.high %v1367, 0
        %v1378 = vcombine.high %v1374, 0
        %v1379 = vcombine.low %v1283, %v1290
        %v1381 = vunpack.c.l.s4 1983009808
        %v1382 = vunpack.c.0.s8 %v1381
        %v1383 = vlaneseq
        %v1384 = vshrl.u32 %v1383, 7
        %v1385 = vsub.s32 %v1382, %v1384
        %v1386 = vrot.slane %v1379, %v1385
        %v1387 = vcombine.low %v1307, %v1308
        %v1389 = vunpack.c.l.s4 1983009808
        %v1390 = vunpack.c.0.s8 %v1389
        %v1391 = vlaneseq
        %v1392 = vshrl.u32 %v1391, 7
        %v1393 = vsub.s32 %v1390, %v1392
        %v1394 = vrot.slane %v1387, %v1393
        %v1395 = vcombine.low %v1299, %v1306
        %v1397 = vunpack.c.l.s4 1983009808
        %v1398 = vunpack.c.0.s8 %v1397
        %v1399 = vlaneseq
        %v1400 = vshrl.u32 %v1399, 7
        %v1401 = vsub.s32 %v1398, %v1400
        %v1402 = vrot.slane %v1395, %v1401
        %v1403 = vcombine.low %v1309, %v1310
        %v1405 = vunpack.c.l.s4 1983009808
        %v1406 = vunpack.c.0.s8 %v1405
        %v1407 = vlaneseq
        %v1408 = vshrl.u32 %v1407, 7
        %v1409 = vsub.s32 %v1406, %v1408
        %v1410 = vrot.slane %v1403, %v1409
        %v1411 = vcombine.low %v1386, %v1394
        %v1412 = vcombine.high %v1386, %v1394
        %v1414 = vunpack.c.l.s4 1934713408
        %v1415 = vunpack.c.0.s8 %v1414
        %v1416 = vlaneseq
        %v1417 = vshrl.u32 %v1416, 7
        %v1418 = vsub.s32 %v1415, %v1417
        %v1419 = vrot.slane %v1411, %v1418
        %v1421 = vunpack.c.l.s4 1934713408
        %v1422 = vunpack.c.0.s8 %v1421
        %v1423 = vlaneseq
        %v1424 = vshrl.u32 %v1423, 7
        %v1425 = vsub.s32 %v1422, %v1424
        %v1426 = vrot.slane %v1412, %v1425
        %v1427 = vcombine.low %v1402, %v1410
        %v1428 = vcombine.high %v1402, %v1410
        %v1430 = vunpack.c.l.s4 1934713408
        %v1431 = vunpack.c.0.s8 %v1430
        %v1432 = vlaneseq
        %v1433 = vshrl.u32 %v1432, 7
        %v1434 = vsub.s32 %v1431, %v1433
        %v1435 = vrot.slane %v1427, %v1434
        %v1437 = vunpack.c.l.s4 1934713408
        %v1438 = vunpack.c.0.s8 %v1437
        %v1439 = vlaneseq
        %v1440 = vshrl.u32 %v1439, 7
        %v1441 = vsub.s32 %v1438, %v1440
        %v1442 = vrot.slane %v1428, %v1441
        %v1443 = vcombine.low %v1419, %v1435
        %v1444 = vcombine.high %v1419, %v1435
        %v1445 = vcombine.low %v1426, %v1442
        %v1446 = vcombine.high %v1426, %v1442
        %v1447 = vcombine.low %v1351, %v1358
        %v1449 = vunpack.c.l.s4 1983009808
        %v1450 = vunpack.c.0.s8 %v1449
        %v1451 = vlaneseq
        %v1452 = vshrl.u32 %v1451, 7
        %v1453 = vsub.s32 %v1450, %v1452
        %v1454 = vrot.slane %v1447, %v1453
        %v1455 = vcombine.low %v1375, %v1376
        %v1457 = vunpack.c.l.s4 1983009808
        %v1458 = vunpack.c.0.s8 %v1457
        %v1459 = vlaneseq
        %v1460 = vshrl.u32 %v1459, 7
        %v1461 = vsub.s32 %v1458, %v1460
        %v1462 = vrot.slane %v1455, %v1461
        %v1463 = vcombine.low %v1367, %v1374
        %v1465 = vunpack.c.l.s4 1983009808
        %v1466 = vunpack.c.0.s8 %v1465
        %v1467 = vlaneseq
        %v1468 = vshrl.u32 %v1467, 7
        %v1469 = vsub.s32 %v1466, %v1468
        %v1470 = vrot.slane %v1463, %v1469
        %v1471 = vcombine.low %v1377, %v1378
        %v1473 = vunpack.c.l.s4 1983009808
        %v1474 = vunpack.c.0.s8 %v1473
        %v1475 = vlaneseq
        %v1476 = vshrl.u32 %v1475, 7
        %v1477 = vsub.s32 %v1474, %v1476
        %v1478 = vrot.slane %v1471, %v1477
        %v1479 = vcombine.low %v1454, %v1462
        %v1480 = vcombine.high %v1454, %v1462
        %v1482 = vunpack.c.l.s4 1934713408
        %v1483 = vunpack.c.0.s8 %v1482
        %v1484 = vlaneseq
        %v1485 = vshrl.u32 %v1484, 7
        %v1486 = vsub.s32 %v1483, %v1485
        %v1487 = vrot.slane %v1479, %v1486
        %v1489 = vunpack.c.l.s4 1934713408
        %v1490 = vunpack.c.0.s8 %v1489
        %v1491 = vlaneseq
        %v1492 = vshrl.u32 %v1491, 7
        %v1493 = vsub.s32 %v1490, %v1492
        %v1494 = vrot.slane %v1480, %v1493
        %v1495 = vcombine.low %v1470, %v1478
        %v1496 = vcombine.high %v1470, %v1478
        %v1498 = vunpack.c.l.s4 1934713408
        %v1499 = vunpack.c.0.s8 %v1498
        %v1500 = vlaneseq
        %v1501 = vshrl.u32 %v1500, 7
        %v1502 = vsub.s32 %v1499, %v1501
        %v1503 = vrot.slane %v1495, %v1502
        %v1505 = vunpack.c.l.s4 1934713408
        %v1506 = vunpack.c.0.s8 %v1505
        %v1507 = vlaneseq
        %v1508 = vshrl.u32 %v1507, 7
        %v1509 = vsub.s32 %v1506, %v1508
        %v1510 = vrot.slane %v1496, %v1509
        %v1511 = vcombine.low %v1487, %v1503
        %v1512 = vcombine.high %v1487, %v1503
        %v1513 = vcombine.low %v1494, %v1510
        %v1514 = vcombine.high %v1494, %v1510
        %v1517 = vpack.i.b16 %v1511, %v1443
        %v1519 = vshrl.u32 %v1443, 16
        %v1520 = vshrl.u32 %v1511, 16
        %v1521 = vpack.i.b16 %v1520, %v1519
        %v1525 = vpack.i.b16 %v1512, %v1444
        %v1527 = vshrl.u32 %v1444, 16
        %v1528 = vshrl.u32 %v1512, 16
        %v1529 = vpack.i.b16 %v1528, %v1527
        %v1533 = vpack.i.b16 %v1513, %v1445
        %v1535 = vshrl.u32 %v1445, 16
        %v1536 = vshrl.u32 %v1513, 16
        %v1537 = vpack.i.b16 %v1536, %v1535
        %v1541 = vpack.i.b16 %v1514, %v1446
        %v1543 = vshrl.u32 %v1446, 16
        %v1544 = vshrl.u32 %v1514, 16
        %v1545 = vpack.i.b16 %v1544, %v1543
        %vm1547 = vcmask 130048
        %v1549 = vsel %vm1547, %v829, 0
        %v1552 = vsel %vm1547, %v1174, 0
        %1554 = vmatprep.subr.bf16.mxu0 0
        %1555 = vmatpush1.bf16.xpose.msra.mxu0 %v1552
        %1556 = vmatprep.subr.bf16.mxu0 0
        %1557 = vmatpush1.bf16.xpose.msra.mxu0 0
        %1558 = vmatprep.subr.bf16.mxu0 0
        %1559 = vmatpush1.bf16.xpose.msra.mxu0 0
        %1560 = vmatprep.subr.bf16.mxu0 0
        %1561 = vmatpush1.bf16.xpose.msra.mxu0 0
        %1562 = vmatprep.subr.bf16.mxu0 0
        %1563 = vmatpush1.bf16.xpose.msra.mxu0 0
        %1564 = vmatprep.subr.bf16.mxu0 0
        %1565 = vmatpush1.bf16.xpose.msra.mxu0 0
        %1566 = vmatprep.subr.bf16.mxu0 0
        %1567 = vmatpush1.bf16.xpose.msra.mxu0 0
        %1568 = vmatprep.subr.bf16.mxu0 0
        %1569 = vmatpush1.bf16.xpose.msra.mxu0 0
        %1570 = vmatprep.subr.bf16.mxu0 0
        %1571 = vmatpush1.bf16.xpose.msra.mxu0 0
        %1572 = vmatprep.subr.bf16.mxu0 0
        %1573 = vmatpush1.bf16.xpose.msra.mxu0 0
        %1574 = vmatprep.subr.bf16.mxu0 0
        %1575 = vmatpush1.bf16.xpose.msra.mxu0 0
        %1576 = vmatprep.subr.bf16.mxu0 0
        %1577 = vmatpush1.bf16.xpose.msra.mxu0 0
        %1578 = vmatprep.subr.bf16.mxu0 0
        %1579 = vmatpush1.bf16.xpose.msra.mxu0 0
        %1580 = vmatprep.subr.bf16.mxu0 0
        %1581 = vmatpush1.bf16.xpose.msra.mxu0 0
        %1582 = vmatprep.subr.bf16.mxu0 0
        %1583 = vmatpush1.bf16.xpose.msra.mxu0 0
        %1584 = vmatprep.subr.bf16.mxu0 0
        %1585 = vmatpush1.bf16.xpose.msra.mxu0 0
        %1586 = vmatprep.mubr.bf16.mxu0 0
        %1587 = vmatmul.mubr.bf16.gmra.mrb[0].mxu0 %v1549
        %v1588 = vpop.f32.mrb[0].mxu0
        %v1589 = vadd.f32 0.0, %v1588
        %v1590 = vpop.f32.mrb[0].mxu0
        %v1591 = vpop.f32.mrb[0].mxu0
        %v1592 = vadd.f32 0.0, %v1591
        %v1593 = vpop.f32.mrb[0].mxu0
        %1594 = vdwg.mxu0
        %v1596 = vsel %vm1547, %v832, 0
        %v1599 = vsel %vm1547, %v1177, 0
        %1601 = vmatprep.subr.bf16.mxu0 0
        %1602 = vmatpush1.bf16.xpose.msra.mxu0 %v1599
        %1603 = vmatprep.subr.bf16.mxu0 0
        %1604 = vmatpush1.bf16.xpose.msra.mxu0 0
        %1605 = vmatprep.subr.bf16.mxu0 0
        %1606 = vmatpush1.bf16.xpose.msra.mxu0 0
        %1607 = vmatprep.subr.bf16.mxu0 0
        %1608 = vmatpush1.bf16.xpose.msra.mxu0 0
        %1609 = vmatprep.subr.bf16.mxu0 0
        %1610 = vmatpush1.bf16.xpose.msra.mxu0 0
        %1611 = vmatprep.subr.bf16.mxu0 0
        %1612 = vmatpush1.bf16.xpose.msra.mxu0 0
        %1613 = vmatprep.subr.bf16.mxu0 0
        %1614 = vmatpush1.bf16.xpose.msra.mxu0 0
        %1615 = vmatprep.subr.bf16.mxu0 0
        %1616 = vmatpush1.bf16.xpose.msra.mxu0 0
        %1617 = vmatprep.subr.bf16.mxu0 0
        %1618 = vmatpush1.bf16.xpose.msra.mxu0 0
        %1619 = vmatprep.subr.bf16.mxu0 0
        %1620 = vmatpush1.bf16.xpose.msra.mxu0 0
        %1621 = vmatprep.subr.bf16.mxu0 0
        %1622 = vmatpush1.bf16.xpose.msra.mxu0 0
        %1623 = vmatprep.subr.bf16.mxu0 0
        %1624 = vmatpush1.bf16.xpose.msra.mxu0 0
        %1625 = vmatprep.subr.bf16.mxu0 0
        %1626 = vmatpush1.bf16.xpose.msra.mxu0 0
        %1627 = vmatprep.subr.bf16.mxu0 0
        %1628 = vmatpush1.bf16.xpose.msra.mxu0 0
        %1629 = vmatprep.subr.bf16.mxu0 0
        %1630 = vmatpush1.bf16.xpose.msra.mxu0 0
        %1631 = vmatprep.subr.bf16.mxu0 0
        %1632 = vmatpush1.bf16.xpose.msra.mxu0 0
        %1633 = vmatprep.mubr.bf16.mxu0 0
        %1634 = vmatmul.mubr.bf16.gmra.mrb[0].mxu0 %v1596
        %v1635 = vpop.f32.mrb[0].mxu0
        %v1636 = vadd.f32 0.0, %v1635
        %v1637 = vpop.f32.mrb[0].mxu0
        %v1638 = vpop.f32.mrb[0].mxu0
        %v1639 = vadd.f32 0.0, %v1638
        %v1640 = vpop.f32.mrb[0].mxu0
        %1641 = vdwg.mxu0
        %v1643 = vsel %vm1547, %v835, 0
        %v1646 = vsel %vm1547, %v1180, 0
        %1648 = vmatprep.subr.bf16.mxu0 0
        %1649 = vmatpush1.bf16.xpose.msra.mxu0 %v1646
        %1650 = vmatprep.subr.bf16.mxu0 0
        %1651 = vmatpush1.bf16.xpose.msra.mxu0 0
        %1652 = vmatprep.subr.bf16.mxu0 0
        %1653 = vmatpush1.bf16.xpose.msra.mxu0 0
        %1654 = vmatprep.subr.bf16.mxu0 0
        %1655 = vmatpush1.bf16.xpose.msra.mxu0 0
        %1656 = vmatprep.subr.bf16.mxu0 0
        %1657 = vmatpush1.bf16.xpose.msra.mxu0 0
        %1658 = vmatprep.subr.bf16.mxu0 0
        %1659 = vmatpush1.bf16.xpose.msra.mxu0 0
        %1660 = vmatprep.subr.bf16.mxu0 0
        %1661 = vmatpush1.bf16.xpose.msra.mxu0 0
        %1662 = vmatprep.subr.bf16.mxu0 0
        %1663 = vmatpush1.bf16.xpose.msra.mxu0 0
        %1664 = vmatprep.subr.bf16.mxu0 0
        %1665 = vmatpush1.bf16.xpose.msra.mxu0 0
        %1666 = vmatprep.subr.bf16.mxu0 0
        %1667 = vmatpush1.bf16.xpose.msra.mxu0 0
        %1668 = vmatprep.subr.bf16.mxu0 0
        %1669 = vmatpush1.bf16.xpose.msra.mxu0 0
        %1670 = vmatprep.subr.bf16.mxu0 0
        %1671 = vmatpush1.bf16.xpose.msra.mxu0 0
        %1672 = vmatprep.subr.bf16.mxu0 0
        %1673 = vmatpush1.bf16.xpose.msra.mxu0 0
        %1674 = vmatprep.subr.bf16.mxu0 0
        %1675 = vmatpush1.bf16.xpose.msra.mxu0 0
        %1676 = vmatprep.subr.bf16.mxu0 0
        %1677 = vmatpush1.bf16.xpose.msra.mxu0 0
        %1678 = vmatprep.subr.bf16.mxu0 0
        %1679 = vmatpush1.bf16.xpose.msra.mxu0 0
        %1680 = vmatprep.mubr.bf16.mxu0 0
        %1681 = vmatmul.mubr.bf16.gmra.mrb[0].mxu0 %v1643
        %v1682 = vpop.f32.mrb[0].mxu0
        %v1683 = vadd.f32 0.0, %v1682
        %v1684 = vpop.f32.mrb[0].mxu0
        %v1685 = vpop.f32.mrb[0].mxu0
        %v1686 = vadd.f32 0.0, %v1685
        %v1687 = vpop.f32.mrb[0].mxu0
        %1688 = vdwg.mxu0
        %v1690 = vsel %vm1547, %v838, 0
        %v1693 = vsel %vm1547, %v1183, 0
        %1695 = vmatprep.subr.bf16.mxu0 0
        %1696 = vmatpush1.bf16.xpose.msra.mxu0 %v1693
        %1697 = vmatprep.subr.bf16.mxu0 0
        %1698 = vmatpush1.bf16.xpose.msra.mxu0 0
        %1699 = vmatprep.subr.bf16.mxu0 0
        %1700 = vmatpush1.bf16.xpose.msra.mxu0 0
        %1701 = vmatprep.subr.bf16.mxu0 0
        %1702 = vmatpush1.bf16.xpose.msra.mxu0 0
        %1703 = vmatprep.subr.bf16.mxu0 0
        %1704 = vmatpush1.bf16.xpose.msra.mxu0 0
        %1705 = vmatprep.subr.bf16.mxu0 0
        %1706 = vmatpush1.bf16.xpose.msra.mxu0 0
        %1707 = vmatprep.subr.bf16.mxu0 0
        %1708 = vmatpush1.bf16.xpose.msra.mxu0 0
        %1709 = vmatprep.subr.bf16.mxu0 0
        %1710 = vmatpush1.bf16.xpose.msra.mxu0 0
        %1711 = vmatprep.subr.bf16.mxu0 0
        %1712 = vmatpush1.bf16.xpose.msra.mxu0 0
        %1713 = vmatprep.subr.bf16.mxu0 0
        %1714 = vmatpush1.bf16.xpose.msra.mxu0 0
        %1715 = vmatprep.subr.bf16.mxu0 0
        %1716 = vmatpush1.bf16.xpose.msra.mxu0 0
        %1717 = vmatprep.subr.bf16.mxu0 0
        %1718 = vmatpush1.bf16.xpose.msra.mxu0 0
        %1719 = vmatprep.subr.bf16.mxu0 0
        %1720 = vmatpush1.bf16.xpose.msra.mxu0 0
        %1721 = vmatprep.subr.bf16.mxu0 0
        %1722 = vmatpush1.bf16.xpose.msra.mxu0 0
        %1723 = vmatprep.subr.bf16.mxu0 0
        %1724 = vmatpush1.bf16.xpose.msra.mxu0 0
        %1725 = vmatprep.subr.bf16.mxu0 0
        %1726 = vmatpush1.bf16.xpose.msra.mxu0 0
        %1727 = vmatprep.mubr.bf16.mxu0 0
        %1728 = vmatmul.mubr.bf16.gmra.mrb[0].mxu0 %v1690
        %v1729 = vpop.f32.mrb[0].mxu0
        %v1730 = vadd.f32 0.0, %v1729
        %v1731 = vpop.f32.mrb[0].mxu0
        %v1732 = vpop.f32.mrb[0].mxu0
        %v1733 = vadd.f32 0.0, %v1732
        %v1734 = vpop.f32.mrb[0].mxu0
        %1735 = vdwg.mxu0
        %v1737 = vsel %vm1547, %v841, 0
        %v1740 = vsel %vm1547, %v1186, 0
        %1742 = vmatprep.subr.bf16.mxu0 0
        %1743 = vmatpush1.bf16.xpose.msra.mxu0 %v1740
        %1744 = vmatprep.subr.bf16.mxu0 0
        %1745 = vmatpush1.bf16.xpose.msra.mxu0 0
        %1746 = vmatprep.subr.bf16.mxu0 0
        %1747 = vmatpush1.bf16.xpose.msra.mxu0 0
        %1748 = vmatprep.subr.bf16.mxu0 0
        %1749 = vmatpush1.bf16.xpose.msra.mxu0 0
        %1750 = vmatprep.subr.bf16.mxu0 0
        %1751 = vmatpush1.bf16.xpose.msra.mxu0 0
        %1752 = vmatprep.subr.bf16.mxu0 0
        %1753 = vmatpush1.bf16.xpose.msra.mxu0 0
        %1754 = vmatprep.subr.bf16.mxu0 0
        %1755 = vmatpush1.bf16.xpose.msra.mxu0 0
        %1756 = vmatprep.subr.bf16.mxu0 0
        %1757 = vmatpush1.bf16.xpose.msra.mxu0 0
        %1758 = vmatprep.subr.bf16.mxu0 0
        %1759 = vmatpush1.bf16.xpose.msra.mxu0 0
        %1760 = vmatprep.subr.bf16.mxu0 0
        %1761 = vmatpush1.bf16.xpose.msra.mxu0 0
        %1762 = vmatprep.subr.bf16.mxu0 0
        %1763 = vmatpush1.bf16.xpose.msra.mxu0 0
        %1764 = vmatprep.subr.bf16.mxu0 0
        %1765 = vmatpush1.bf16.xpose.msra.mxu0 0
        %1766 = vmatprep.subr.bf16.mxu0 0
        %1767 = vmatpush1.bf16.xpose.msra.mxu0 0
        %1768 = vmatprep.subr.bf16.mxu0 0
        %1769 = vmatpush1.bf16.xpose.msra.mxu0 0
        %1770 = vmatprep.subr.bf16.mxu0 0
        %1771 = vmatpush1.bf16.xpose.msra.mxu0 0
        %1772 = vmatprep.subr.bf16.mxu0 0
        %1773 = vmatpush1.bf16.xpose.msra.mxu0 0
        %1774 = vmatprep.mubr.bf16.mxu0 0
        %1775 = vmatmul.mubr.bf16.gmra.mrb[0].mxu0 %v1737
        %v1776 = vpop.f32.mrb[0].mxu0
        %v1777 = vadd.f32 0.0, %v1776
        %v1778 = vpop.f32.mrb[0].mxu0
        %v1779 = vpop.f32.mrb[0].mxu0
        %v1780 = vadd.f32 0.0, %v1779
        %v1781 = vpop.f32.mrb[0].mxu0
        %1782 = vdwg.mxu0
        %v1784 = vsel %vm1547, %v844, 0
        %v1787 = vsel %vm1547, %v1189, 0
        %1789 = vmatprep.subr.bf16.mxu0 0
        %1790 = vmatpush1.bf16.xpose.msra.mxu0 %v1787
        %1791 = vmatprep.subr.bf16.mxu0 0
        %1792 = vmatpush1.bf16.xpose.msra.mxu0 0
        %1793 = vmatprep.subr.bf16.mxu0 0
        %1794 = vmatpush1.bf16.xpose.msra.mxu0 0
        %1795 = vmatprep.subr.bf16.mxu0 0
        %1796 = vmatpush1.bf16.xpose.msra.mxu0 0
        %1797 = vmatprep.subr.bf16.mxu0 0
        %1798 = vmatpush1.bf16.xpose.msra.mxu0 0
        %1799 = vmatprep.subr.bf16.mxu0 0
        %1800 = vmatpush1.bf16.xpose.msra.mxu0 0
        %1801 = vmatprep.subr.bf16.mxu0 0
        %1802 = vmatpush1.bf16.xpose.msra.mxu0 0
        %1803 = vmatprep.subr.bf16.mxu0 0
        %1804 = vmatpush1.bf16.xpose.msra.mxu0 0
        %1805 = vmatprep.subr.bf16.mxu0 0
        %1806 = vmatpush1.bf16.xpose.msra.mxu0 0
        %1807 = vmatprep.subr.bf16.mxu0 0
        %1808 = vmatpush1.bf16.xpose.msra.mxu0 0
        %1809 = vmatprep.subr.bf16.mxu0 0
        %1810 = vmatpush1.bf16.xpose.msra.mxu0 0
        %1811 = vmatprep.subr.bf16.mxu0 0
        %1812 = vmatpush1.bf16.xpose.msra.mxu0 0
        %1813 = vmatprep.subr.bf16.mxu0 0
        %1814 = vmatpush1.bf16.xpose.msra.mxu0 0
        %1815 = vmatprep.subr.bf16.mxu0 0
        %1816 = vmatpush1.bf16.xpose.msra.mxu0 0
        %1817 = vmatprep.subr.bf16.mxu0 0
        %1818 = vmatpush1.bf16.xpose.msra.mxu0 0
        %1819 = vmatprep.subr.bf16.mxu0 0
        %1820 = vmatpush1.bf16.xpose.msra.mxu0 0
        %1821 = vmatprep.mubr.bf16.mxu0 0
        %1822 = vmatmul.mubr.bf16.gmra.mrb[0].mxu0 %v1784
        %v1823 = vpop.f32.mrb[0].mxu0
        %v1824 = vadd.f32 0.0, %v1823
        %v1825 = vpop.f32.mrb[0].mxu0
        %v1826 = vpop.f32.mrb[0].mxu0
        %v1827 = vadd.f32 0.0, %v1826
        %v1828 = vpop.f32.mrb[0].mxu0
        %1829 = vdwg.mxu0
        %v1831 = vsel %vm1547, %v847, 0
        %v1834 = vsel %vm1547, %v1192, 0
        %1836 = vmatprep.subr.bf16.mxu0 0
        %1837 = vmatpush1.bf16.xpose.msra.mxu0 %v1834
        %1838 = vmatprep.subr.bf16.mxu0 0
        %1839 = vmatpush1.bf16.xpose.msra.mxu0 0
        %1840 = vmatprep.subr.bf16.mxu0 0
        %1841 = vmatpush1.bf16.xpose.msra.mxu0 0
        %1842 = vmatprep.subr.bf16.mxu0 0
        %1843 = vmatpush1.bf16.xpose.msra.mxu0 0
        %1844 = vmatprep.subr.bf16.mxu0 0
        %1845 = vmatpush1.bf16.xpose.msra.mxu0 0
        %1846 = vmatprep.subr.bf16.mxu0 0
        %1847 = vmatpush1.bf16.xpose.msra.mxu0 0
        %1848 = vmatprep.subr.bf16.mxu0 0
        %1849 = vmatpush1.bf16.xpose.msra.mxu0 0
        %1850 = vmatprep.subr.bf16.mxu0 0
        %1851 = vmatpush1.bf16.xpose.msra.mxu0 0
        %1852 = vmatprep.subr.bf16.mxu0 0
        %1853 = vmatpush1.bf16.xpose.msra.mxu0 0
        %1854 = vmatprep.subr.bf16.mxu0 0
        %1855 = vmatpush1.bf16.xpose.msra.mxu0 0
        %1856 = vmatprep.subr.bf16.mxu0 0
        %1857 = vmatpush1.bf16.xpose.msra.mxu0 0
        %1858 = vmatprep.subr.bf16.mxu0 0
        %1859 = vmatpush1.bf16.xpose.msra.mxu0 0
        %1860 = vmatprep.subr.bf16.mxu0 0
        %1861 = vmatpush1.bf16.xpose.msra.mxu0 0
        %1862 = vmatprep.subr.bf16.mxu0 0
        %1863 = vmatpush1.bf16.xpose.msra.mxu0 0
        %1864 = vmatprep.subr.bf16.mxu0 0
        %1865 = vmatpush1.bf16.xpose.msra.mxu0 0
        %1866 = vmatprep.subr.bf16.mxu0 0
        %1867 = vmatpush1.bf16.xpose.msra.mxu0 0
        %1868 = vmatprep.mubr.bf16.mxu0 0
        %1869 = vmatmul.mubr.bf16.gmra.mrb[0].mxu0 %v1831
        %v1870 = vpop.f32.mrb[0].mxu0
        %v1871 = vadd.f32 0.0, %v1870
        %v1872 = vpop.f32.mrb[0].mxu0
        %v1873 = vpop.f32.mrb[0].mxu0
        %v1874 = vadd.f32 0.0, %v1873
        %v1875 = vpop.f32.mrb[0].mxu0
        %1876 = vdwg.mxu0
        %v1878 = vsel %vm1547, %v850, 0
        %v1881 = vsel %vm1547, %v1195, 0
        %1883 = vmatprep.subr.bf16.mxu0 0
        %1884 = vmatpush1.bf16.xpose.msra.mxu0 %v1881
        %1885 = vmatprep.subr.bf16.mxu0 0
        %1886 = vmatpush1.bf16.xpose.msra.mxu0 0
        %1887 = vmatprep.subr.bf16.mxu0 0
        %1888 = vmatpush1.bf16.xpose.msra.mxu0 0
        %1889 = vmatprep.subr.bf16.mxu0 0
        %1890 = vmatpush1.bf16.xpose.msra.mxu0 0
        %1891 = vmatprep.subr.bf16.mxu0 0
        %1892 = vmatpush1.bf16.xpose.msra.mxu0 0
        %1893 = vmatprep.subr.bf16.mxu0 0
        %1894 = vmatpush1.bf16.xpose.msra.mxu0 0
        %1895 = vmatprep.subr.bf16.mxu0 0
        %1896 = vmatpush1.bf16.xpose.msra.mxu0 0
        %1897 = vmatprep.subr.bf16.mxu0 0
        %1898 = vmatpush1.bf16.xpose.msra.mxu0 0
        %1899 = vmatprep.subr.bf16.mxu0 0
        %1900 = vmatpush1.bf16.xpose.msra.mxu0 0
        %1901 = vmatprep.subr.bf16.mxu0 0
        %1902 = vmatpush1.bf16.xpose.msra.mxu0 0
        %1903 = vmatprep.subr.bf16.mxu0 0
        %1904 = vmatpush1.bf16.xpose.msra.mxu0 0
        %1905 = vmatprep.subr.bf16.mxu0 0
        %1906 = vmatpush1.bf16.xpose.msra.mxu0 0
        %1907 = vmatprep.subr.bf16.mxu0 0
        %1908 = vmatpush1.bf16.xpose.msra.mxu0 0
        %1909 = vmatprep.subr.bf16.mxu0 0
        %1910 = vmatpush1.bf16.xpose.msra.mxu0 0
        %1911 = vmatprep.subr.bf16.mxu0 0
        %1912 = vmatpush1.bf16.xpose.msra.mxu0 0
        %1913 = vmatprep.subr.bf16.mxu0 0
        %1914 = vmatpush1.bf16.xpose.msra.mxu0 0
        %1915 = vmatprep.mubr.bf16.mxu0 0
        %1916 = vmatmul.mubr.bf16.gmra.mrb[0].mxu0 %v1878
        %v1917 = vpop.f32.mrb[0].mxu0
        %v1918 = vadd.f32 0.0, %v1917
        %v1919 = vpop.f32.mrb[0].mxu0
        %v1920 = vpop.f32.mrb[0].mxu0
        %v1921 = vadd.f32 0.0, %v1920
        %v1922 = vpop.f32.mrb[0].mxu0
        %1923 = vdwg.mxu0
        %v1924 = vsel %vm1547, %v1589, -inf
        %1925 = vmax.xlane.f32.xlu0 %v1924
        %v1926 = vpop.xlane.xlu0 %1925
        %v1927 = vsel %vm1547, %v1592, -inf
        %1928 = vmax.xlane.f32.xlu0 %v1927
        %v1929 = vpop.xlane.xlu0 %1928
        %v1930 = vsel %vm1547, %v1636, -inf
        %1931 = vmax.xlane.f32.xlu0 %v1930
        %v1932 = vpop.xlane.xlu0 %1931
        %v1933 = vsel %vm1547, %v1639, -inf
        %1934 = vmax.xlane.f32.xlu0 %v1933
        %v1935 = vpop.xlane.xlu0 %1934
        %v1936 = vsel %vm1547, %v1683, -inf
        %1937 = vmax.xlane.f32.xlu0 %v1936
        %v1938 = vpop.xlane.xlu0 %1937
        %v1939 = vsel %vm1547, %v1686, -inf
        %1940 = vmax.xlane.f32.xlu0 %v1939
        %v1941 = vpop.xlane.xlu0 %1940
        %v1942 = vsel %vm1547, %v1730, -inf
        %1943 = vmax.xlane.f32.xlu0 %v1942
        %v1944 = vpop.xlane.xlu0 %1943
        %v1945 = vsel %vm1547, %v1733, -inf
        %1946 = vmax.xlane.f32.xlu0 %v1945
        %v1947 = vpop.xlane.xlu0 %1946
        %v1948 = vsel %vm1547, %v1777, -inf
        %1949 = vmax.xlane.f32.xlu0 %v1948
        %v1950 = vpop.xlane.xlu0 %1949
        %v1951 = vsel %vm1547, %v1780, -inf
        %1952 = vmax.xlane.f32.xlu0 %v1951
        %v1953 = vpop.xlane.xlu0 %1952
        %v1954 = vsel %vm1547, %v1824, -inf
        %1955 = vmax.xlane.f32.xlu0 %v1954
        %v1956 = vpop.xlane.xlu0 %1955
        %v1957 = vsel %vm1547, %v1827, -inf
        %1958 = vmax.xlane.f32.xlu0 %v1957
        %v1959 = vpop.xlane.xlu0 %1958
        %v1960 = vsel %vm1547, %v1871, -inf
        %1961 = vmax.xlane.f32.xlu0 %v1960
        %v1962 = vpop.xlane.xlu0 %1961
        %v1963 = vsel %vm1547, %v1874, -inf
        %1964 = vmax.xlane.f32.xlu0 %v1963
        %v1965 = vpop.xlane.xlu0 %1964
        %v1966 = vsel %vm1547, %v1918, -inf
        %1967 = vmax.xlane.f32.xlu0 %v1966
        %v1968 = vpop.xlane.xlu0 %1967
        %v1969 = vsel %vm1547, %v1921, -inf
        %1970 = vmax.xlane.f32.xlu0 %v1969
        %v1971 = vpop.xlane.xlu0 %1970
        %v1972 = vsub.f32 %v1589, %v1926
        %v1973 = vsub.f32 %v1592, %v1929
        %v1974 = vsub.f32 %v1636, %v1932
        %v1975 = vsub.f32 %v1639, %v1935
        %v1976 = vsub.f32 %v1683, %v1938
        %v1977 = vsub.f32 %v1686, %v1941
        %v1978 = vsub.f32 %v1730, %v1944
        %v1979 = vsub.f32 %v1733, %v1947
        %v1980 = vsub.f32 %v1777, %v1950
        %v1981 = vsub.f32 %v1780, %v1953
        %v1982 = vsub.f32 %v1824, %v1956
        %v1983 = vsub.f32 %v1827, %v1959
        %v1984 = vsub.f32 %v1871, %v1962
        %v1985 = vsub.f32 %v1874, %v1965
        %v1986 = vsub.f32 %v1918, %v1968
        %v1987 = vsub.f32 %v1921, %v1971
        %v1988 = vpack.c.bf16 %v1973, %v1972
        %v1989 = vpack.c.bf16 %v1975, %v1974
        %v1990 = vpack.c.bf16 %v1977, %v1976
        %v1991 = vpack.c.bf16 %v1979, %v1978
        %v1992 = vpack.c.bf16 %v1981, %v1980
        %v1993 = vpack.c.bf16 %v1983, %v1982
        %v1994 = vpack.c.bf16 %v1985, %v1984
        %v1995 = vpack.c.bf16 %v1987, %v1986
        %v1997 = vmul.bf16 %v1988, 1069105081
        %v1998 = vpow.bf16.pop %v1997
        %v2000 = vmul.bf16 %v1989, 1069105081
        %v2001 = vpow.bf16.pop %v2000
        %v2003 = vmul.bf16 %v1990, 1069105081
        %v2004 = vpow.bf16.pop %v2003
        %v2006 = vmul.bf16 %v1991, 1069105081
        %v2007 = vpow.bf16.pop %v2006
        %v2009 = vmul.bf16 %v1992, 1069105081
        %v2010 = vpow.bf16.pop %v2009
        %v2012 = vmul.bf16 %v1993, 1069105081
        %v2013 = vpow.bf16.pop %v2012
        %v2015 = vmul.bf16 %v1994, 1069105081
        %v2016 = vpow.bf16.pop %v2015
        %v2018 = vmul.bf16 %v1995, 1069105081
        %v2019 = vpow.bf16.pop %v2018
        %v2020 = vunpack.c.l.bf16 %v1998
        %v2021 = vunpack.c.h.bf16 %v1998
        %v2022 = vunpack.c.l.bf16 %v2001
        %v2023 = vunpack.c.h.bf16 %v2001
        %v2024 = vunpack.c.l.bf16 %v2004
        %v2025 = vunpack.c.h.bf16 %v2004
        %v2026 = vunpack.c.l.bf16 %v2007
        %v2027 = vunpack.c.h.bf16 %v2007
        %v2028 = vunpack.c.l.bf16 %v2010
        %v2029 = vunpack.c.h.bf16 %v2010
        %v2030 = vunpack.c.l.bf16 %v2013
        %v2031 = vunpack.c.h.bf16 %v2013
        %v2032 = vunpack.c.l.bf16 %v2016
        %v2033 = vunpack.c.h.bf16 %v2016
        %v2034 = vunpack.c.l.bf16 %v2019
        %v2035 = vunpack.c.h.bf16 %v2019
        %v2036 = vsel %vm1547, %v2020, 0.0
        %2037 = vadd.xlane.f32.xlu0 %v2036
        %v2038 = vpop.xlane.xlu0 %2037
        %v2039 = vsel %vm1547, %v2021, 0.0
        %2040 = vadd.xlane.f32.xlu0 %v2039
        %v2041 = vpop.xlane.xlu0 %2040
        %v2042 = vsel %vm1547, %v2022, 0.0
        %2043 = vadd.xlane.f32.xlu0 %v2042
        %v2044 = vpop.xlane.xlu0 %2043
        %v2045 = vsel %vm1547, %v2023, 0.0
        %2046 = vadd.xlane.f32.xlu0 %v2045
        %v2047 = vpop.xlane.xlu0 %2046
        %v2048 = vsel %vm1547, %v2024, 0.0
        %2049 = vadd.xlane.f32.xlu0 %v2048
        %v2050 = vpop.xlane.xlu0 %2049
        %v2051 = vsel %vm1547, %v2025, 0.0
        %2052 = vadd.xlane.f32.xlu0 %v2051
        %v2053 = vpop.xlane.xlu0 %2052
        %v2054 = vsel %vm1547, %v2026, 0.0
        %2055 = vadd.xlane.f32.xlu0 %v2054
        %v2056 = vpop.xlane.xlu0 %2055
        %v2057 = vsel %vm1547, %v2027, 0.0
        %2058 = vadd.xlane.f32.xlu0 %v2057
        %v2059 = vpop.xlane.xlu0 %2058
        %v2060 = vsel %vm1547, %v2028, 0.0
        %2061 = vadd.xlane.f32.xlu0 %v2060
        %v2062 = vpop.xlane.xlu0 %2061
        %v2063 = vsel %vm1547, %v2029, 0.0
        %2064 = vadd.xlane.f32.xlu0 %v2063
        %v2065 = vpop.xlane.xlu0 %2064
        %v2066 = vsel %vm1547, %v2030, 0.0
        %2067 = vadd.xlane.f32.xlu0 %v2066
        %v2068 = vpop.xlane.xlu0 %2067
        %v2069 = vsel %vm1547, %v2031, 0.0
        %2070 = vadd.xlane.f32.xlu0 %v2069
        %v2071 = vpop.xlane.xlu0 %2070
        %v2072 = vsel %vm1547, %v2032, 0.0
        %2073 = vadd.xlane.f32.xlu0 %v2072
        %v2074 = vpop.xlane.xlu0 %2073
        %v2075 = vsel %vm1547, %v2033, 0.0
        %2076 = vadd.xlane.f32.xlu0 %v2075
        %v2077 = vpop.xlane.xlu0 %2076
        %v2078 = vsel %vm1547, %v2034, 0.0
        %2079 = vadd.xlane.f32.xlu0 %v2078
        %v2080 = vpop.xlane.xlu0 %2079
        %v2081 = vsel %vm1547, %v2035, 0.0
        %2082 = vadd.xlane.f32.xlu0 %v2081
        %v2083 = vpop.xlane.xlu0 %2082
        %v2085 = vsel %vm1547, %v1998, 0
        %2087 = vmatprep.subr.bf16.mxu0 0
        %2088 = vmatpush1.bf16.msra.mxu0 %v1517
        %2089 = vmatprep.subr.bf16.mxu0 0
        %2090 = vmatpush1.bf16.msra.mxu0 0
        %2091 = vmatprep.subr.bf16.mxu0 0
        %2092 = vmatpush1.bf16.msra.mxu0 0
        %2093 = vmatprep.subr.bf16.mxu0 0
        %2094 = vmatpush1.bf16.msra.mxu0 0
        %2095 = vmatprep.subr.bf16.mxu0 0
        %2096 = vmatpush1.bf16.msra.mxu0 0
        %2097 = vmatprep.subr.bf16.mxu0 0
        %2098 = vmatpush1.bf16.msra.mxu0 0
        %2099 = vmatprep.subr.bf16.mxu0 0
        %2100 = vmatpush1.bf16.msra.mxu0 0
        %2101 = vmatprep.subr.bf16.mxu0 0
        %2102 = vmatpush1.bf16.msra.mxu0 0
        %2103 = vmatprep.subr.bf16.mxu0 0
        %2104 = vmatpush1.bf16.msra.mxu0 0
        %2105 = vmatprep.subr.bf16.mxu0 0
        %2106 = vmatpush1.bf16.msra.mxu0 0
        %2107 = vmatprep.subr.bf16.mxu0 0
        %2108 = vmatpush1.bf16.msra.mxu0 0
        %2109 = vmatprep.subr.bf16.mxu0 0
        %2110 = vmatpush1.bf16.msra.mxu0 0
        %2111 = vmatprep.subr.bf16.mxu0 0
        %2112 = vmatpush1.bf16.msra.mxu0 0
        %2113 = vmatprep.subr.bf16.mxu0 0
        %2114 = vmatpush1.bf16.msra.mxu0 0
        %2115 = vmatprep.subr.bf16.mxu0 0
        %2116 = vmatpush1.bf16.msra.mxu0 0
        %2117 = vmatprep.subr.bf16.mxu0 0
        %2118 = vmatpush1.bf16.msra.mxu0 0
        %2119 = vmatprep.mubr.bf16.mxu0 0
        %2120 = vmatmul.mubr.bf16.gmra.mrb[0].mxu0 %v2085
        %v2121 = vpop.f32.mrb[0].mxu0
        %v2122 = vadd.f32 0.0, %v2121
        %v2123 = vpop.f32.mrb[0].mxu0
        %v2124 = vpop.f32.mrb[0].mxu0
        %v2125 = vadd.f32 0.0, %v2124
        %v2126 = vpop.f32.mrb[0].mxu0
        %2127 = vdwg.mxu0
        %v2129 = vsel %vm1547, %v2001, 0
        %2131 = vmatprep.subr.bf16.mxu0 0
        %2132 = vmatpush1.bf16.msra.mxu0 %v1521
        %2133 = vmatprep.subr.bf16.mxu0 0
        %2134 = vmatpush1.bf16.msra.mxu0 0
        %2135 = vmatprep.subr.bf16.mxu0 0
        %2136 = vmatpush1.bf16.msra.mxu0 0
        %2137 = vmatprep.subr.bf16.mxu0 0
        %2138 = vmatpush1.bf16.msra.mxu0 0
        %2139 = vmatprep.subr.bf16.mxu0 0
        %2140 = vmatpush1.bf16.msra.mxu0 0
        %2141 = vmatprep.subr.bf16.mxu0 0
        %2142 = vmatpush1.bf16.msra.mxu0 0
        %2143 = vmatprep.subr.bf16.mxu0 0
        %2144 = vmatpush1.bf16.msra.mxu0 0
        %2145 = vmatprep.subr.bf16.mxu0 0
        %2146 = vmatpush1.bf16.msra.mxu0 0
        %2147 = vmatprep.subr.bf16.mxu0 0
        %2148 = vmatpush1.bf16.msra.mxu0 0
        %2149 = vmatprep.subr.bf16.mxu0 0
        %2150 = vmatpush1.bf16.msra.mxu0 0
        %2151 = vmatprep.subr.bf16.mxu0 0
        %2152 = vmatpush1.bf16.msra.mxu0 0
        %2153 = vmatprep.subr.bf16.mxu0 0
        %2154 = vmatpush1.bf16.msra.mxu0 0
        %2155 = vmatprep.subr.bf16.mxu0 0
        %2156 = vmatpush1.bf16.msra.mxu0 0
        %2157 = vmatprep.subr.bf16.mxu0 0
        %2158 = vmatpush1.bf16.msra.mxu0 0
        %2159 = vmatprep.subr.bf16.mxu0 0
        %2160 = vmatpush1.bf16.msra.mxu0 0
        %2161 = vmatprep.subr.bf16.mxu0 0
        %2162 = vmatpush1.bf16.msra.mxu0 0
        %2163 = vmatprep.mubr.bf16.mxu0 0
        %2164 = vmatmul.mubr.bf16.gmra.mrb[0].mxu0 %v2129
        %v2165 = vpop.f32.mrb[0].mxu0
        %v2166 = vadd.f32 0.0, %v2165
        %v2167 = vpop.f32.mrb[0].mxu0
        %v2168 = vpop.f32.mrb[0].mxu0
        %v2169 = vadd.f32 0.0, %v2168
        %v2170 = vpop.f32.mrb[0].mxu0
        %2171 = vdwg.mxu0
        %v2173 = vsel %vm1547, %v2004, 0
        %2175 = vmatprep.subr.bf16.mxu0 0
        %2176 = vmatpush1.bf16.msra.mxu0 %v1525
        %2177 = vmatprep.subr.bf16.mxu0 0
        %2178 = vmatpush1.bf16.msra.mxu0 0
        %2179 = vmatprep.subr.bf16.mxu0 0
        %2180 = vmatpush1.bf16.msra.mxu0 0
        %2181 = vmatprep.subr.bf16.mxu0 0
        %2182 = vmatpush1.bf16.msra.mxu0 0
        %2183 = vmatprep.subr.bf16.mxu0 0
        %2184 = vmatpush1.bf16.msra.mxu0 0
        %2185 = vmatprep.subr.bf16.mxu0 0
        %2186 = vmatpush1.bf16.msra.mxu0 0
        %2187 = vmatprep.subr.bf16.mxu0 0
        %2188 = vmatpush1.bf16.msra.mxu0 0
        %2189 = vmatprep.subr.bf16.mxu0 0
        %2190 = vmatpush1.bf16.msra.mxu0 0
        %2191 = vmatprep.subr.bf16.mxu0 0
        %2192 = vmatpush1.bf16.msra.mxu0 0
        %2193 = vmatprep.subr.bf16.mxu0 0
        %2194 = vmatpush1.bf16.msra.mxu0 0
        %2195 = vmatprep.subr.bf16.mxu0 0
        %2196 = vmatpush1.bf16.msra.mxu0 0
        %2197 = vmatprep.subr.bf16.mxu0 0
        %2198 = vmatpush1.bf16.msra.mxu0 0
        %2199 = vmatprep.subr.bf16.mxu0 0
        %2200 = vmatpush1.bf16.msra.mxu0 0
        %2201 = vmatprep.subr.bf16.mxu0 0
        %2202 = vmatpush1.bf16.msra.mxu0 0
        %2203 = vmatprep.subr.bf16.mxu0 0
        %2204 = vmatpush1.bf16.msra.mxu0 0
        %2205 = vmatprep.subr.bf16.mxu0 0
        %2206 = vmatpush1.bf16.msra.mxu0 0
        %2207 = vmatprep.mubr.bf16.mxu0 0
        %2208 = vmatmul.mubr.bf16.gmra.mrb[0].mxu0 %v2173
        %v2209 = vpop.f32.mrb[0].mxu0
        %v2210 = vadd.f32 0.0, %v2209
        %v2211 = vpop.f32.mrb[0].mxu0
        %v2212 = vpop.f32.mrb[0].mxu0
        %v2213 = vadd.f32 0.0, %v2212
        %v2214 = vpop.f32.mrb[0].mxu0
        %2215 = vdwg.mxu0
        %v2217 = vsel %vm1547, %v2007, 0
        %2219 = vmatprep.subr.bf16.mxu0 0
        %2220 = vmatpush1.bf16.msra.mxu0 %v1529
        %2221 = vmatprep.subr.bf16.mxu0 0
        %2222 = vmatpush1.bf16.msra.mxu0 0
        %2223 = vmatprep.subr.bf16.mxu0 0
        %2224 = vmatpush1.bf16.msra.mxu0 0
        %2225 = vmatprep.subr.bf16.mxu0 0
        %2226 = vmatpush1.bf16.msra.mxu0 0
        %2227 = vmatprep.subr.bf16.mxu0 0
        %2228 = vmatpush1.bf16.msra.mxu0 0
        %2229 = vmatprep.subr.bf16.mxu0 0
        %2230 = vmatpush1.bf16.msra.mxu0 0
        %2231 = vmatprep.subr.bf16.mxu0 0
        %2232 = vmatpush1.bf16.msra.mxu0 0
        %2233 = vmatprep.subr.bf16.mxu0 0
        %2234 = vmatpush1.bf16.msra.mxu0 0
        %2235 = vmatprep.subr.bf16.mxu0 0
        %2236 = vmatpush1.bf16.msra.mxu0 0
        %2237 = vmatprep.subr.bf16.mxu0 0
        %2238 = vmatpush1.bf16.msra.mxu0 0
        %2239 = vmatprep.subr.bf16.mxu0 0
        %2240 = vmatpush1.bf16.msra.mxu0 0
        %2241 = vmatprep.subr.bf16.mxu0 0
        %2242 = vmatpush1.bf16.msra.mxu0 0
        %2243 = vmatprep.subr.bf16.mxu0 0
        %2244 = vmatpush1.bf16.msra.mxu0 0
        %2245 = vmatprep.subr.bf16.mxu0 0
        %2246 = vmatpush1.bf16.msra.mxu0 0
        %2247 = vmatprep.subr.bf16.mxu0 0
        %2248 = vmatpush1.bf16.msra.mxu0 0
        %2249 = vmatprep.subr.bf16.mxu0 0
        %2250 = vmatpush1.bf16.msra.mxu0 0
        %2251 = vmatprep.mubr.bf16.mxu0 0
        %2252 = vmatmul.mubr.bf16.gmra.mrb[0].mxu0 %v2217
        %v2253 = vpop.f32.mrb[0].mxu0
        %v2254 = vadd.f32 0.0, %v2253
        %v2255 = vpop.f32.mrb[0].mxu0
        %v2256 = vpop.f32.mrb[0].mxu0
        %v2257 = vadd.f32 0.0, %v2256
        %v2258 = vpop.f32.mrb[0].mxu0
        %2259 = vdwg.mxu0
        %v2261 = vsel %vm1547, %v2010, 0
        %2263 = vmatprep.subr.bf16.mxu0 0
        %2264 = vmatpush1.bf16.msra.mxu0 %v1533
        %2265 = vmatprep.subr.bf16.mxu0 0
        %2266 = vmatpush1.bf16.msra.mxu0 0
        %2267 = vmatprep.subr.bf16.mxu0 0
        %2268 = vmatpush1.bf16.msra.mxu0 0
        %2269 = vmatprep.subr.bf16.mxu0 0
        %2270 = vmatpush1.bf16.msra.mxu0 0
        %2271 = vmatprep.subr.bf16.mxu0 0
        %2272 = vmatpush1.bf16.msra.mxu0 0
        %2273 = vmatprep.subr.bf16.mxu0 0
        %2274 = vmatpush1.bf16.msra.mxu0 0
        %2275 = vmatprep.subr.bf16.mxu0 0
        %2276 = vmatpush1.bf16.msra.mxu0 0
        %2277 = vmatprep.subr.bf16.mxu0 0
        %2278 = vmatpush1.bf16.msra.mxu0 0
        %2279 = vmatprep.subr.bf16.mxu0 0
        %2280 = vmatpush1.bf16.msra.mxu0 0
        %2281 = vmatprep.subr.bf16.mxu0 0
        %2282 = vmatpush1.bf16.msra.mxu0 0
        %2283 = vmatprep.subr.bf16.mxu0 0
        %2284 = vmatpush1.bf16.msra.mxu0 0
        %2285 = vmatprep.subr.bf16.mxu0 0
        %2286 = vmatpush1.bf16.msra.mxu0 0
        %2287 = vmatprep.subr.bf16.mxu0 0
        %2288 = vmatpush1.bf16.msra.mxu0 0
        %2289 = vmatprep.subr.bf16.mxu0 0
        %2290 = vmatpush1.bf16.msra.mxu0 0
        %2291 = vmatprep.subr.bf16.mxu0 0
        %2292 = vmatpush1.bf16.msra.mxu0 0
        %2293 = vmatprep.subr.bf16.mxu0 0
        %2294 = vmatpush1.bf16.msra.mxu0 0
        %2295 = vmatprep.mubr.bf16.mxu0 0
        %2296 = vmatmul.mubr.bf16.gmra.mrb[0].mxu0 %v2261
        %v2297 = vpop.f32.mrb[0].mxu0
        %v2298 = vadd.f32 0.0, %v2297
        %v2299 = vpop.f32.mrb[0].mxu0
        %v2300 = vpop.f32.mrb[0].mxu0
        %v2301 = vadd.f32 0.0, %v2300
        %v2302 = vpop.f32.mrb[0].mxu0
        %2303 = vdwg.mxu0
        %v2305 = vsel %vm1547, %v2013, 0
        %2307 = vmatprep.subr.bf16.mxu0 0
        %2308 = vmatpush1.bf16.msra.mxu0 %v1537
        %2309 = vmatprep.subr.bf16.mxu0 0
        %2310 = vmatpush1.bf16.msra.mxu0 0
        %2311 = vmatprep.subr.bf16.mxu0 0
        %2312 = vmatpush1.bf16.msra.mxu0 0
        %2313 = vmatprep.subr.bf16.mxu0 0
        %2314 = vmatpush1.bf16.msra.mxu0 0
        %2315 = vmatprep.subr.bf16.mxu0 0
        %2316 = vmatpush1.bf16.msra.mxu0 0
        %2317 = vmatprep.subr.bf16.mxu0 0
        %2318 = vmatpush1.bf16.msra.mxu0 0
        %2319 = vmatprep.subr.bf16.mxu0 0
        %2320 = vmatpush1.bf16.msra.mxu0 0
        %2321 = vmatprep.subr.bf16.mxu0 0
        %2322 = vmatpush1.bf16.msra.mxu0 0
        %2323 = vmatprep.subr.bf16.mxu0 0
        %2324 = vmatpush1.bf16.msra.mxu0 0
        %2325 = vmatprep.subr.bf16.mxu0 0
        %2326 = vmatpush1.bf16.msra.mxu0 0
        %2327 = vmatprep.subr.bf16.mxu0 0
        %2328 = vmatpush1.bf16.msra.mxu0 0
        %2329 = vmatprep.subr.bf16.mxu0 0
        %2330 = vmatpush1.bf16.msra.mxu0 0
        %2331 = vmatprep.subr.bf16.mxu0 0
        %2332 = vmatpush1.bf16.msra.mxu0 0
        %2333 = vmatprep.subr.bf16.mxu0 0
        %2334 = vmatpush1.bf16.msra.mxu0 0
        %2335 = vmatprep.subr.bf16.mxu0 0
        %2336 = vmatpush1.bf16.msra.mxu0 0
        %2337 = vmatprep.subr.bf16.mxu0 0
        %2338 = vmatpush1.bf16.msra.mxu0 0
        %2339 = vmatprep.mubr.bf16.mxu0 0
        %2340 = vmatmul.mubr.bf16.gmra.mrb[0].mxu0 %v2305
        %v2341 = vpop.f32.mrb[0].mxu0
        %v2342 = vadd.f32 0.0, %v2341
        %v2343 = vpop.f32.mrb[0].mxu0
        %v2344 = vpop.f32.mrb[0].mxu0
        %v2345 = vadd.f32 0.0, %v2344
        %v2346 = vpop.f32.mrb[0].mxu0
        %2347 = vdwg.mxu0
        %v2349 = vsel %vm1547, %v2016, 0
        %2351 = vmatprep.subr.bf16.mxu0 0
        %2352 = vmatpush1.bf16.msra.mxu0 %v1541
        %2353 = vmatprep.subr.bf16.mxu0 0
        %2354 = vmatpush1.bf16.msra.mxu0 0
        %2355 = vmatprep.subr.bf16.mxu0 0
        %2356 = vmatpush1.bf16.msra.mxu0 0
        %2357 = vmatprep.subr.bf16.mxu0 0
        %2358 = vmatpush1.bf16.msra.mxu0 0
        %2359 = vmatprep.subr.bf16.mxu0 0
        %2360 = vmatpush1.bf16.msra.mxu0 0
        %2361 = vmatprep.subr.bf16.mxu0 0
        %2362 = vmatpush1.bf16.msra.mxu0 0
        %2363 = vmatprep.subr.bf16.mxu0 0
        %2364 = vmatpush1.bf16.msra.mxu0 0
        %2365 = vmatprep.subr.bf16.mxu0 0
        %2366 = vmatpush1.bf16.msra.mxu0 0
        %2367 = vmatprep.subr.bf16.mxu0 0
        %2368 = vmatpush1.bf16.msra.mxu0 0
        %2369 = vmatprep.subr.bf16.mxu0 0
        %2370 = vmatpush1.bf16.msra.mxu0 0
        %2371 = vmatprep.subr.bf16.mxu0 0
        %2372 = vmatpush1.bf16.msra.mxu0 0
        %2373 = vmatprep.subr.bf16.mxu0 0
        %2374 = vmatpush1.bf16.msra.mxu0 0
        %2375 = vmatprep.subr.bf16.mxu0 0
        %2376 = vmatpush1.bf16.msra.mxu0 0
        %2377 = vmatprep.subr.bf16.mxu0 0
        %2378 = vmatpush1.bf16.msra.mxu0 0
        %2379 = vmatprep.subr.bf16.mxu0 0
        %2380 = vmatpush1.bf16.msra.mxu0 0
        %2381 = vmatprep.subr.bf16.mxu0 0
        %2382 = vmatpush1.bf16.msra.mxu0 0
        %2383 = vmatprep.mubr.bf16.mxu0 0
        %2384 = vmatmul.mubr.bf16.gmra.mrb[0].mxu0 %v2349
        %v2385 = vpop.f32.mrb[0].mxu0
        %v2386 = vadd.f32 0.0, %v2385
        %v2387 = vpop.f32.mrb[0].mxu0
        %v2388 = vpop.f32.mrb[0].mxu0
        %v2389 = vadd.f32 0.0, %v2388
        %v2390 = vpop.f32.mrb[0].mxu0
        %2391 = vdwg.mxu0
        %v2393 = vsel %vm1547, %v2019, 0
        %2395 = vmatprep.subr.bf16.mxu0 0
        %2396 = vmatpush1.bf16.msra.mxu0 %v1545
        %2397 = vmatprep.subr.bf16.mxu0 0
        %2398 = vmatpush1.bf16.msra.mxu0 0
        %2399 = vmatprep.subr.bf16.mxu0 0
        %2400 = vmatpush1.bf16.msra.mxu0 0
        %2401 = vmatprep.subr.bf16.mxu0 0
        %2402 = vmatpush1.bf16.msra.mxu0 0
        %2403 = vmatprep.subr.bf16.mxu0 0
        %2404 = vmatpush1.bf16.msra.mxu0 0
        %2405 = vmatprep.subr.bf16.mxu0 0
        %2406 = vmatpush1.bf16.msra.mxu0 0
        %2407 = vmatprep.subr.bf16.mxu0 0
        %2408 = vmatpush1.bf16.msra.mxu0 0
        %2409 = vmatprep.subr.bf16.mxu0 0
        %2410 = vmatpush1.bf16.msra.mxu0 0
        %2411 = vmatprep.subr.bf16.mxu0 0
        %2412 = vmatpush1.bf16.msra.mxu0 0
        %2413 = vmatprep.subr.bf16.mxu0 0
        %2414 = vmatpush1.bf16.msra.mxu0 0
        %2415 = vmatprep.subr.bf16.mxu0 0
        %2416 = vmatpush1.bf16.msra.mxu0 0
        %2417 = vmatprep.subr.bf16.mxu0 0
        %2418 = vmatpush1.bf16.msra.mxu0 0
        %2419 = vmatprep.subr.bf16.mxu0 0
        %2420 = vmatpush1.bf16.msra.mxu0 0
        %2421 = vmatprep.subr.bf16.mxu0 0
        %2422 = vmatpush1.bf16.msra.mxu0 0
        %2423 = vmatprep.subr.bf16.mxu0 0
        %2424 = vmatpush1.bf16.msra.mxu0 0
        %2425 = vmatprep.subr.bf16.mxu0 0
        %2426 = vmatpush1.bf16.msra.mxu0 0
        %2427 = vmatprep.mubr.bf16.mxu0 0
        %2428 = vmatmul.mubr.bf16.gmra.mrb[0].mxu0 %v2393
        %v2429 = vpop.f32.mrb[0].mxu0
        %v2430 = vadd.f32 0.0, %v2429
        %v2431 = vpop.f32.mrb[0].mxu0
        %v2432 = vpop.f32.mrb[0].mxu0
        %v2433 = vadd.f32 0.0, %v2432
        %v2434 = vpop.f32.mrb[0].mxu0
        %2435 = vdwg.mxu0
        %v2436 = vrcp.pop %v2038
        %v2437 = vrcp.pop %v2041
        %v2438 = vrcp.pop %v2044
        %v2439 = vrcp.pop %v2047
        %v2440 = vrcp.pop %v2050
        %v2441 = vrcp.pop %v2053
        %v2442 = vrcp.pop %v2056
        %v2443 = vrcp.pop %v2059
        %v2444 = vrcp.pop %v2062
        %v2445 = vrcp.pop %v2065
        %v2446 = vrcp.pop %v2068
        %v2447 = vrcp.pop %v2071
        %v2448 = vrcp.pop %v2074
        %v2449 = vrcp.pop %v2077
        %v2450 = vrcp.pop %v2080
        %v2451 = vrcp.pop %v2083
        %v2452 = vmul.f32 %v2122, %v2436
        %v2453 = vmul.f32 %v2125, %v2437
        %v2454 = vmul.f32 %v2166, %v2438
        %v2455 = vmul.f32 %v2169, %v2439
        %v2456 = vmul.f32 %v2210, %v2440
        %v2457 = vmul.f32 %v2213, %v2441
        %v2458 = vmul.f32 %v2254, %v2442
        %v2459 = vmul.f32 %v2257, %v2443
        %v2460 = vmul.f32 %v2298, %v2444
        %v2461 = vmul.f32 %v2301, %v2445
        %v2462 = vmul.f32 %v2342, %v2446
        %v2463 = vmul.f32 %v2345, %v2447
        %v2464 = vmul.f32 %v2386, %v2448
        %v2465 = vmul.f32 %v2389, %v2449
        %v2466 = vmul.f32 %v2430, %v2450
        %v2467 = vmul.f32 %v2433, %v2451
        %v2468 = vpack.c.bf16 %v2453, %v2452
        %v2469 = vpack.c.bf16 %v2455, %v2454
        %v2470 = vpack.c.bf16 %v2457, %v2456
        %v2471 = vpack.c.bf16 %v2459, %v2458
        %v2472 = vpack.c.bf16 %v2461, %v2460
        %v2473 = vpack.c.bf16 %v2463, %v2462
        %v2474 = vpack.c.bf16 %v2465, %v2464
        %v2475 = vpack.c.bf16 %v2467, %v2466
        %v2478 = vpack.i.b16 %v2469, %v2468
        %v2480 = vshrl.u32 %v2468, 16
        %v2481 = vshrl.u32 %v2469, 16
        %v2482 = vpack.i.b16 %v2481, %v2480
        %v2486 = vpack.i.b16 %v2471, %v2470
        %v2488 = vshrl.u32 %v2470, 16
        %v2489 = vshrl.u32 %v2471, 16
        %v2490 = vpack.i.b16 %v2489, %v2488
        %v2494 = vpack.i.b16 %v2473, %v2472
        %v2496 = vshrl.u32 %v2472, 16
        %v2497 = vshrl.u32 %v2473, 16
        %v2498 = vpack.i.b16 %v2497, %v2496
        %v2502 = vpack.i.b16 %v2475, %v2474
        %v2504 = vshrl.u32 %v2474, 16
        %v2505 = vshrl.u32 %v2475, 16
        %v2506 = vpack.i.b16 %v2505, %v2504
        %v2508 = vcombine.low %v2478, %v2494
        %v2509 = vcombine.high %v2478, %v2494
        %v2511 = vunpack.c.l.s4 1983009808
        %v2512 = vunpack.c.0.s8 %v2511
        %v2513 = vlaneseq
        %v2514 = vshrl.u32 %v2513, 7
        %v2515 = vsub.s32 %v2512, %v2514
        %v2516 = vrot.slane %v2508, %v2515
        %v2518 = vunpack.c.l.s4 1983009808
        %v2519 = vunpack.c.0.s8 %v2518
        %v2520 = vlaneseq
        %v2521 = vshrl.u32 %v2520, 7
        %v2522 = vsub.s32 %v2519, %v2521
        %v2523 = vrot.slane %v2509, %v2522
        %v2524 = vcombine.low %v2486, %v2502
        %v2525 = vcombine.high %v2486, %v2502
        %v2527 = vunpack.c.l.s4 1983009808
        %v2528 = vunpack.c.0.s8 %v2527
        %v2529 = vlaneseq
        %v2530 = vshrl.u32 %v2529, 7
        %v2531 = vsub.s32 %v2528, %v2530
        %v2532 = vrot.slane %v2524, %v2531
        %v2534 = vunpack.c.l.s4 1983009808
        %v2535 = vunpack.c.0.s8 %v2534
        %v2536 = vlaneseq
        %v2537 = vshrl.u32 %v2536, 7
        %v2538 = vsub.s32 %v2535, %v2537
        %v2539 = vrot.slane %v2525, %v2538
        %v2540 = vcombine.low %v2516, %v2532
        %v2541 = vcombine.high %v2516, %v2532
        %v2543 = vunpack.c.l.s4 1934713408
        %v2544 = vunpack.c.0.s8 %v2543
        %v2545 = vlaneseq
        %v2546 = vshrl.u32 %v2545, 7
        %v2547 = vsub.s32 %v2544, %v2546
        %v2548 = vrot.slane %v2540, %v2547
        %v2550 = vunpack.c.l.s4 1934713408
        %v2551 = vunpack.c.0.s8 %v2550
        %v2552 = vlaneseq
        %v2553 = vshrl.u32 %v2552, 7
        %v2554 = vsub.s32 %v2551, %v2553
        %v2555 = vrot.slane %v2541, %v2554
        %v2556 = vcombine.low %v2523, %v2539
        %v2557 = vcombine.high %v2523, %v2539
        %v2559 = vunpack.c.l.s4 1934713408
        %v2560 = vunpack.c.0.s8 %v2559
        %v2561 = vlaneseq
        %v2562 = vshrl.u32 %v2561, 7
        %v2563 = vsub.s32 %v2560, %v2562
        %v2564 = vrot.slane %v2556, %v2563
        %v2566 = vunpack.c.l.s4 1934713408
        %v2567 = vunpack.c.0.s8 %v2566
        %v2568 = vlaneseq
        %v2569 = vshrl.u32 %v2568, 7
        %v2570 = vsub.s32 %v2567, %v2569
        %v2571 = vrot.slane %v2557, %v2570
        %v2572 = vcombine.high %v2548, 0
        %v2573 = vcombine.high %v2555, 0
        %v2574 = vcombine.high %v2564, 0
        %v2575 = vcombine.high %v2571, 0
        %v2576 = vcombine.low %v2482, %v2498
        %v2577 = vcombine.high %v2482, %v2498
        %v2579 = vunpack.c.l.s4 1983009808
        %v2580 = vunpack.c.0.s8 %v2579
        %v2581 = vlaneseq
        %v2582 = vshrl.u32 %v2581, 7
        %v2583 = vsub.s32 %v2580, %v2582
        %v2584 = vrot.slane %v2576, %v2583
        %v2586 = vunpack.c.l.s4 1983009808
        %v2587 = vunpack.c.0.s8 %v2586
        %v2588 = vlaneseq
        %v2589 = vshrl.u32 %v2588, 7
        %v2590 = vsub.s32 %v2587, %v2589
        %v2591 = vrot.slane %v2577, %v2590
        %v2592 = vcombine.low %v2490, %v2506
        %v2593 = vcombine.high %v2490, %v2506
        %v2595 = vunpack.c.l.s4 1983009808
        %v2596 = vunpack.c.0.s8 %v2595
        %v2597 = vlaneseq
        %v2598 = vshrl.u32 %v2597, 7
        %v2599 = vsub.s32 %v2596, %v2598
        %v2600 = vrot.slane %v2592, %v2599
        %v2602 = vunpack.c.l.s4 1983009808
        %v2603 = vunpack.c.0.s8 %v2602
        %v2604 = vlaneseq
        %v2605 = vshrl.u32 %v2604, 7
        %v2606 = vsub.s32 %v2603, %v2605
        %v2607 = vrot.slane %v2593, %v2606
        %v2608 = vcombine.low %v2584, %v2600
        %v2609 = vcombine.high %v2584, %v2600
        %v2611 = vunpack.c.l.s4 1934713408
        %v2612 = vunpack.c.0.s8 %v2611
        %v2613 = vlaneseq
        %v2614 = vshrl.u32 %v2613, 7
        %v2615 = vsub.s32 %v2612, %v2614
        %v2616 = vrot.slane %v2608, %v2615
        %v2618 = vunpack.c.l.s4 1934713408
        %v2619 = vunpack.c.0.s8 %v2618
        %v2620 = vlaneseq
        %v2621 = vshrl.u32 %v2620, 7
        %v2622 = vsub.s32 %v2619, %v2621
        %v2623 = vrot.slane %v2609, %v2622
        %v2624 = vcombine.low %v2591, %v2607
        %v2625 = vcombine.high %v2591, %v2607
        %v2627 = vunpack.c.l.s4 1934713408
        %v2628 = vunpack.c.0.s8 %v2627
        %v2629 = vlaneseq
        %v2630 = vshrl.u32 %v2629, 7
        %v2631 = vsub.s32 %v2628, %v2630
        %v2632 = vrot.slane %v2624, %v2631
        %v2634 = vunpack.c.l.s4 1934713408
        %v2635 = vunpack.c.0.s8 %v2634
        %v2636 = vlaneseq
        %v2637 = vshrl.u32 %v2636, 7
        %v2638 = vsub.s32 %v2635, %v2637
        %v2639 = vrot.slane %v2625, %v2638
        %v2640 = vcombine.high %v2616, 0
        %v2641 = vcombine.high %v2623, 0
        %v2642 = vcombine.high %v2632, 0
        %v2643 = vcombine.high %v2639, 0
        %v2644 = vcombine.low %v2548, %v2555
        %v2646 = vunpack.c.l.s4 1983009808
        %v2647 = vunpack.c.0.s8 %v2646
        %v2648 = vlaneseq
        %v2649 = vshrl.u32 %v2648, 7
        %v2650 = vsub.s32 %v2647, %v2649
        %v2651 = vrot.slane %v2644, %v2650
        %v2652 = vcombine.low %v2572, %v2573
        %v2654 = vunpack.c.l.s4 1983009808
        %v2655 = vunpack.c.0.s8 %v2654
        %v2656 = vlaneseq
        %v2657 = vshrl.u32 %v2656, 7
        %v2658 = vsub.s32 %v2655, %v2657
        %v2659 = vrot.slane %v2652, %v2658
        %v2660 = vcombine.low %v2564, %v2571
        %v2662 = vunpack.c.l.s4 1983009808
        %v2663 = vunpack.c.0.s8 %v2662
        %v2664 = vlaneseq
        %v2665 = vshrl.u32 %v2664, 7
        %v2666 = vsub.s32 %v2663, %v2665
        %v2667 = vrot.slane %v2660, %v2666
        %v2668 = vcombine.low %v2574, %v2575
        %v2670 = vunpack.c.l.s4 1983009808
        %v2671 = vunpack.c.0.s8 %v2670
        %v2672 = vlaneseq
        %v2673 = vshrl.u32 %v2672, 7
        %v2674 = vsub.s32 %v2671, %v2673
        %v2675 = vrot.slane %v2668, %v2674
        %v2676 = vcombine.low %v2651, %v2659
        %v2677 = vcombine.high %v2651, %v2659
        %v2679 = vunpack.c.l.s4 1934713408
        %v2680 = vunpack.c.0.s8 %v2679
        %v2681 = vlaneseq
        %v2682 = vshrl.u32 %v2681, 7
        %v2683 = vsub.s32 %v2680, %v2682
        %v2684 = vrot.slane %v2676, %v2683
        %v2686 = vunpack.c.l.s4 1934713408
        %v2687 = vunpack.c.0.s8 %v2686
        %v2688 = vlaneseq
        %v2689 = vshrl.u32 %v2688, 7
        %v2690 = vsub.s32 %v2687, %v2689
        %v2691 = vrot.slane %v2677, %v2690
        %v2692 = vcombine.low %v2667, %v2675
        %v2693 = vcombine.high %v2667, %v2675
        %v2695 = vunpack.c.l.s4 1934713408
        %v2696 = vunpack.c.0.s8 %v2695
        %v2697 = vlaneseq
        %v2698 = vshrl.u32 %v2697, 7
        %v2699 = vsub.s32 %v2696, %v2698
        %v2700 = vrot.slane %v2692, %v2699
        %v2702 = vunpack.c.l.s4 1934713408
        %v2703 = vunpack.c.0.s8 %v2702
        %v2704 = vlaneseq
        %v2705 = vshrl.u32 %v2704, 7
        %v2706 = vsub.s32 %v2703, %v2705
        %v2707 = vrot.slane %v2693, %v2706
        %v2708 = vcombine.low %v2684, %v2700
        %v2709 = vcombine.high %v2684, %v2700
        %v2710 = vcombine.low %v2691, %v2707
        %v2711 = vcombine.high %v2691, %v2707
        %v2712 = vcombine.low %v2616, %v2623
        %v2714 = vunpack.c.l.s4 1983009808
        %v2715 = vunpack.c.0.s8 %v2714
        %v2716 = vlaneseq
        %v2717 = vshrl.u32 %v2716, 7
        %v2718 = vsub.s32 %v2715, %v2717
        %v2719 = vrot.slane %v2712, %v2718
        %v2720 = vcombine.low %v2640, %v2641
        %v2722 = vunpack.c.l.s4 1983009808
        %v2723 = vunpack.c.0.s8 %v2722
        %v2724 = vlaneseq
        %v2725 = vshrl.u32 %v2724, 7
        %v2726 = vsub.s32 %v2723, %v2725
        %v2727 = vrot.slane %v2720, %v2726
        %v2728 = vcombine.low %v2632, %v2639
        %v2730 = vunpack.c.l.s4 1983009808
        %v2731 = vunpack.c.0.s8 %v2730
        %v2732 = vlaneseq
        %v2733 = vshrl.u32 %v2732, 7
        %v2734 = vsub.s32 %v2731, %v2733
        %v2735 = vrot.slane %v2728, %v2734
        %v2736 = vcombine.low %v2642, %v2643
        %v2738 = vunpack.c.l.s4 1983009808
        %v2739 = vunpack.c.0.s8 %v2738
        %v2740 = vlaneseq
        %v2741 = vshrl.u32 %v2740, 7
        %v2742 = vsub.s32 %v2739, %v2741
        %v2743 = vrot.slane %v2736, %v2742
        %v2744 = vcombine.low %v2719, %v2727
        %v2745 = vcombine.high %v2719, %v2727
        %v2747 = vunpack.c.l.s4 1934713408
        %v2748 = vunpack.c.0.s8 %v2747
        %v2749 = vlaneseq
        %v2750 = vshrl.u32 %v2749, 7
        %v2751 = vsub.s32 %v2748, %v2750
        %v2752 = vrot.slane %v2744, %v2751
        %v2754 = vunpack.c.l.s4 1934713408
        %v2755 = vunpack.c.0.s8 %v2754
        %v2756 = vlaneseq
        %v2757 = vshrl.u32 %v2756, 7
        %v2758 = vsub.s32 %v2755, %v2757
        %v2759 = vrot.slane %v2745, %v2758
        %v2760 = vcombine.low %v2735, %v2743
        %v2761 = vcombine.high %v2735, %v2743
        %v2763 = vunpack.c.l.s4 1934713408
        %v2764 = vunpack.c.0.s8 %v2763
        %v2765 = vlaneseq
        %v2766 = vshrl.u32 %v2765, 7
        %v2767 = vsub.s32 %v2764, %v2766
        %v2768 = vrot.slane %v2760, %v2767
        %v2770 = vunpack.c.l.s4 1934713408
        %v2771 = vunpack.c.0.s8 %v2770
        %v2772 = vlaneseq
        %v2773 = vshrl.u32 %v2772, 7
        %v2774 = vsub.s32 %v2771, %v2773
        %v2775 = vrot.slane %v2761, %v2774
        %v2776 = vcombine.low %v2752, %v2768
        %v2777 = vcombine.high %v2752, %v2768
        %v2778 = vcombine.low %v2759, %v2775
        %v2779 = vcombine.high %v2759, %v2775
        %v2782 = vpack.i.b16 %v2776, %v2708
        %v2783 = vshrl.u32 %v2708, 16
        %v2784 = vshrl.u32 %v2776, 16
        %v2785 = vpack.i.b16 %v2784, %v2783
        %v2788 = vpack.i.b16 %v2777, %v2709
        %v2789 = vshrl.u32 %v2709, 16
        %v2790 = vshrl.u32 %v2777, 16
        %v2791 = vpack.i.b16 %v2790, %v2789
        %v2794 = vpack.i.b16 %v2778, %v2710
        %v2795 = vshrl.u32 %v2710, 16
        %v2796 = vshrl.u32 %v2778, 16
        %v2797 = vpack.i.b16 %v2796, %v2795
        %v2800 = vpack.i.b16 %v2779, %v2711
        %v2801 = vshrl.u32 %v2711, 16
        %v2802 = vshrl.u32 %v2779, 16
        %v2803 = vpack.i.b16 %v2802, %v2801
        %2804 = vrot.lane.b32.xlu0 %v2785, 16
        %v2805 = vpop.permute.xlu0 %2804
        %2806 = vrot.lane.b32.xlu0 %v2788, 32
        %v2807 = vpop.permute.xlu0 %2806
        %2808 = vrot.lane.b32.xlu0 %v2791, 48
        %v2809 = vpop.permute.xlu0 %2808
        %2810 = vrot.lane.b32.xlu0 %v2794, 64
        %v2811 = vpop.permute.xlu0 %2810
        %2812 = vrot.lane.b32.xlu0 %v2797, 80
        %v2813 = vpop.permute.xlu0 %2812
        %2814 = vrot.lane.b32.xlu0 %v2800, 96
        %v2815 = vpop.permute.xlu0 %2814
        %2816 = vrot.lane.b32.xlu0 %v2803, 112
        %v2817 = vpop.permute.xlu0 %2816
        %v2820 = vsel %vm1547, %v2782, %v2805
        %vm2821 = vcmask 261120
        %v2823 = vsel %vm2821, %v2820, %v2807
        %vm2824 = vcmask 392192
        %v2826 = vsel %vm2824, %v2823, %v2809
        %vm2827 = vcmask 523264
        %v2829 = vsel %vm2827, %v2826, %v2811
        %vm2830 = vcmask 654336
        %v2832 = vsel %vm2830, %v2829, %v2813
        %vm2833 = vcmask 785408
        %v2835 = vsel %vm2833, %v2832, %v2815
        %vm2836 = vcmask 916480
        %v2838 = vsel %vm2836, %v2835, %v2817
        %v2840 = vld [vmem:[#allocation8] sm:$0xf]
        %v2841 = vld [vmem:[#allocation8 + $0x4] sm:$0xf]
        %v2842 = vld [vmem:[#allocation8 + $0x8] sm:$0xf]
        %v2843 = vld [vmem:[#allocation8 + $0xc] sm:$0xf]
        %v2844 = vld [vmem:[#allocation8 + $0x10] sm:$0xf]
        %v2845 = vld [vmem:[#allocation8 + $0x14] sm:$0xf]
        %v2846 = vld [vmem:[#allocation8 + $0x18] sm:$0xf]
        %v2847 = vld [vmem:[#allocation8 + $0x1c] sm:$0xf]
        %v2848 = vld [vmem:[#allocation8 + $0x20] sm:$0xf]
        %v2849 = vld [vmem:[#allocation8 + $0x24] sm:$0xf]
        %v2850 = vld [vmem:[#allocation8 + $0x28] sm:$0xf]
        %v2851 = vld [vmem:[#allocation8 + $0x2c] sm:$0xf]
        %v2852 = vld [vmem:[#allocation8 + $0x30] sm:$0xf]
        %v2853 = vld [vmem:[#allocation8 + $0x34] sm:$0xf]
        %v2854 = vld [vmem:[#allocation8 + $0x38] sm:$0xf]
        %v2855 = vld [vmem:[#allocation8 + $0x3c] sm:$0xf]
        %v2872 = vunpack.c.l.b16 %v2840
        %v2873 = vunpack.c.l.b16 %v2841
        %v2874 = vunpack.c.l.b16 %v2842
        %v2875 = vunpack.c.l.b16 %v2843
        %v2876 = vunpack.c.l.b16 %v2844
        %v2877 = vunpack.c.l.b16 %v2845
        %v2878 = vunpack.c.l.b16 %v2846
        %v2879 = vunpack.c.l.b16 %v2847
        %v2880 = vunpack.c.l.b16 %v2848
        %v2881 = vunpack.c.l.b16 %v2849
        %v2882 = vunpack.c.l.b16 %v2850
        %v2883 = vunpack.c.l.b16 %v2851
        %v2884 = vunpack.c.l.b16 %v2852
        %v2885 = vunpack.c.l.b16 %v2853
        %v2886 = vunpack.c.l.b16 %v2854
        %v2887 = vunpack.c.l.b16 %v2855
        %v2888 = vpack.c.b16 %v2873, %v2872
        %v2889 = vpack.c.b16 %v2875, %v2874
        %v2890 = vpack.c.b16 %v2877, %v2876
        %v2891 = vpack.c.b16 %v2879, %v2878
        %v2892 = vpack.c.b16 %v2881, %v2880
        %v2893 = vpack.c.b16 %v2883, %v2882
        %v2894 = vpack.c.b16 %v2885, %v2884
        %v2895 = vpack.c.b16 %v2887, %v2886
        %2904 = vmatprep.subr.bf16.mxu0 0
        %2905 = vmatpush1.bf16.msra.mxu0 %v2888
        %2906 = vmatprep.subr.bf16.mxu0 0
        %2907 = vmatpush1.bf16.msra.mxu0 %v2889
        %2908 = vmatprep.subr.bf16.mxu0 0
        %2909 = vmatpush1.bf16.msra.mxu0 %v2890
        %2910 = vmatprep.subr.bf16.mxu0 0
        %2911 = vmatpush1.bf16.msra.mxu0 %v2891
        %2912 = vmatprep.subr.bf16.mxu0 0
        %2913 = vmatpush1.bf16.msra.mxu0 %v2892
        %2914 = vmatprep.subr.bf16.mxu0 0
        %2915 = vmatpush1.bf16.msra.mxu0 %v2893
        %2916 = vmatprep.subr.bf16.mxu0 0
        %2917 = vmatpush1.bf16.msra.mxu0 %v2894
        %2918 = vmatprep.subr.bf16.mxu0 0
        %2919 = vmatpush1.bf16.msra.mxu0 %v2895
        %2920 = vmatprep.subr.bf16.mxu0 0
        %2921 = vmatpush1.bf16.msra.mxu0 0
        %2922 = vmatprep.subr.bf16.mxu0 0
        %2923 = vmatpush1.bf16.msra.mxu0 0
        %2924 = vmatprep.subr.bf16.mxu0 0
        %2925 = vmatpush1.bf16.msra.mxu0 0
        %2926 = vmatprep.subr.bf16.mxu0 0
        %2927 = vmatpush1.bf16.msra.mxu0 0
        %2928 = vmatprep.subr.bf16.mxu0 0
        %2929 = vmatpush1.bf16.msra.mxu0 0
        %2930 = vmatprep.subr.bf16.mxu0 0
        %2931 = vmatpush1.bf16.msra.mxu0 0
        %2932 = vmatprep.subr.bf16.mxu0 0
        %2933 = vmatpush1.bf16.msra.mxu0 0
        %2934 = vmatprep.subr.bf16.mxu0 0
        %2935 = vmatpush1.bf16.msra.mxu0 0
        %2936 = vmatprep.mubr.bf16.mxu0 0
        %2937 = vmatmul.mubr.bf16.gmra.mrb[0].mxu0 %v2838
        %v2938 = vpop.f32.mrb[0].mxu0
        %v2939 = vadd.f32 0.0, %v2938
        %v2940 = vpop.f32.mrb[0].mxu0
        %v2941 = vpop.f32.mrb[0].mxu0
        %v2942 = vadd.f32 0.0, %v2941
        %v2943 = vpop.f32.mrb[0].mxu0
        %2944 = vdwg.mxu0
        %2945 = vst [vmem:[%s231] sm:$0xff] %v2939
        %2946 = vst [vmem:[%s231 + $0x8] sm:$0xff] %v2942
        %s2947 = sand.u32 %s111, 1
        %s2948 = scalar_lea.sflag [#allocation5], %s2947
        %s2949 = sand.u32 %s111, 1
        %s2950 = smul.addr %s2949, 16
        %s2951 = scalar_lea.vmem [#allocation9], %s2950
        // Predicated region
        $region49: #{tpu_custom_call.1} parent=31 // pred_check
          %p2952 = pneg %p121
        $region50: #{tpu_custom_call.1} parent=31 // pred_check_branch
          %2954 = sbr.rel (%p2952) target = $region52
        $region51: #{tpu_custom_call.1} parent=31 // pred_region
          %s2955 = smul.u32 2, %s26
          %s2957 = ssub.s32 256, 256
          %2958 = vsyncadd %s2948, %s2957
          %s2959 = smul.addr %s25, 2
          %s2960 = sadd.s32 %s2955, %s2959
          %s2961 = smul.addr %s2960, 128
          %s2962 = scalar_lea.hbm %s3, %s2961
          %s2963 = sshll.u32 %s2951, 4
          %s2964 = int_to_ptr.vmem [resolvable:$true] %s2963
          %2969 = dma.vmem_to_hbm [thread:$0]  %s2964, 256, %s2962, %s2948, 128, 128, 8
        $region52: #{tpu_custom_call.1} parent=31 // pred_fallthru
          _
      $region32: #{tpu_custom_call.1} parent=5 // pred_fallthru
        _
      %p2970 = scmp.le.s32.totalorder 2, %s16
      // Predicated region
      $region53: #{tpu_custom_call.1} parent=5 // pred_check
        %p2971 = pneg %p2970
      $region54: #{tpu_custom_call.1} parent=5 // pred_check_branch
        %2973 = sbr.rel (%p2971) target = $region56
      $region55: #{tpu_custom_call.1} parent=5 // pred_region
        %s2974 = ssub.s32 %s16, 2
        // Predicated region
        $region57: #{tpu_custom_call.1} parent=55 // pred_check
          %p2975 = pneg %p127
        $region58: #{tpu_custom_call.1} parent=55 // pred_check_branch
          %2977 = sbr.rel (%p2975) target = $region60
        $region59: #{tpu_custom_call.1} parent=55 // pred_region
          %s2978 = sand.u32 %s112, 1
          %s2979 = scalar_lea.sflag [#allocation5], %s2978
          %s2980 = sand.u32 %s112, 1
          %s2981 = smul.addr %s2980, 16
          %s2982 = scalar_lea.vmem [#allocation9], %s2981
          %2983 = dma.done %s2979, 256
        $region60: #{tpu_custom_call.1} parent=55 // pred_fallthru
          _
      $region56: #{tpu_custom_call.1} parent=5 // pred_fallthru
        _
    $region6: #{tpu_custom_call.1} parent=1 // loop_footer
      %s20 = sadd.s32 1, %s16
    $region7: #{tpu_custom_call.1} parent=1 // loop_footer_branch
      %15 = sbr.rel target = $region3
    $region8: #{tpu_custom_call.1} parent=1 // loop_exit
      _
    %2984 = vsyncpa [#allocation4], 1
    %s2985 = scalar_lea.sflag [#allocation4], 1
    %2986 = vsyncpa %s2985, 1
    %2987 = vsyncpa [#allocation7], 1
    %2988 = vsyncpa [#allocation5], 1
    %s2989 = scalar_lea.sflag [#allocation5], 1
    %2990 = vsyncpa %s2989, 1

</llo_original>
